<compile_context>
chip_gen: v6e
topology: v6e:2x2x1
jax: 0.10.0
libtpu: 0.0.40
codegen_flags: <defaults>
</compile_context>

<pallas_src>
import math

import numpy as np
import jax
import jax.numpy as jnp
from jax import lax
from jax.experimental import pallas as pl
from jax.experimental.pallas import tpu as pltpu

W_PAD = 128      # lane tile: packed (elements x time) axis
BN_EPS = 1e-5


def _encoder_kernel(x_ref, lbl1_ref, lbl2_ref, lbl3_ref,
                    w1_ref, w2_ref, w3_ref,
                    sel1_ref, sel2_ref, sel3_ref,
                    out_ref):
    """Runs the whole 3-layer encoder for one packed group of batch elements."""

    def conv_layer(h, w_ref, sel_ref, lbl, *, k, gated):
        c_out2 = w_ref.shape[0] // k
        # One fused MXU dot over all k taps: rows [dk*c_out2:(dk+1)*c_out2] of
        # zh hold tap dk's contribution evaluated at every (unshifted) lane.
        zh = jnp.dot(w_ref[...], h, preferred_element_type=jnp.float32)
        # Label + bias + folded-BN shift, precomputed per group in the wrapper
        # and already laid out lane-dense in the packed output columns.
        y = lbl
        for dk in range(k):
            # Host-precomputed 0/1 block-diagonal selection: fuses tap shift,
            # stride-2 downsample, zero padding and packed-batch boundary
            # masking into a single MXU dot (no in-kernel iota/compare work,
            # no masked stores).
            y = y + jnp.dot(zh[dk * c_out2:(dk + 1) * c_out2], sel_ref[dk],
                            preferred_element_type=jnp.float32)
        if not gated:
            return y
        c = c_out2 // 2
        return y[:c] * jax.nn.sigmoid(y[c:])                      # GLU gate

    x = x_ref[0]                                                  # (n_freq, 128)
    h1 = conv_layer(x, w1_ref, sel1_ref, lbl1_ref[0], k=5, gated=True)
    h2 = conv_layer(h1, w2_ref, sel2_ref, lbl2_ref[0], k=4, gated=True)
    h3 = conv_layer(h2, w3_ref, sel3_ref, lbl3_ref[0], k=4, gated=False)
    out_ref[0] = h3                                               # (2*c3, 128)


def _fold_bn(w, b, gamma, beta, mean, var):
    """Fold inference-form BatchNorm into the conv weight/bias."""
    scale = gamma / jnp.sqrt(var + BN_EPS)
    return w * scale[:, None, None, None], (b - mean) * scale + beta


def _stack_taps(w, n_feat):
    """(c_out2, c_in, 1, k) conv weight -> tap-major 2D weights (feature, label)."""
    c_out2, c_in, _, k = w.shape
    w2 = jnp.transpose(w[:, :, 0, :], (2, 0, 1)).reshape(k * c_out2, c_in)
    return w2[:, :n_feat], w2[:, n_feat:]


def encoder_forward(x, l, params):
    """Pallas Encoder forward ('1D' type, running-stats BatchNorm).

    x: (B, 1, n_freq, T), l: (B, n_label)
      -> (mu, logvar) each of shape (B, n_freq//8, 1, T//4)
    """
    B, _, n_freq, T = x.shape
    n_label = l.shape[1]
    assert T % 4 == 0 and T <= W_PAD, "time axis must be <= 128 and divisible by 4"
    assert n_freq % 8 == 0
    # (n_freq % 32 == 0 keeps every GLU / tap sublane split (8,128)-aligned.)

    c1, c2, c3 = n_freq // 2, n_freq // 4, n_freq // 8

    w1f, b1f = _fold_bn(params["w1"], params["b1"], *params["bn1"])
    w2f, b2f = _fold_bn(params["w2"], params["b2"], *params["bn2"])
    w3f, b3f = params["w3"], params["b3"]

    w1h, w1l = _stack_taps(w1f, n_freq)
    w2h, w2l = _stack_taps(w2f, c1)
    w3h, w3l = _stack_taps(w3f, c2)

    # ---- batch packing along the 128-lane axis -------------------------------
    pack = min(W_PAD // T, B)
    groups = -(-B // pack)
    if groups == 1 and B >= 2:
        # Keep >= 2 parallel grid steps so a dual-TC chip (v7x) uses both cores.
        pack = -(-B // 2)
        groups = 2
    b_pad = groups * pack

    # '1D' mode: permute (B,1,F,T)->(B,F,1,T), drop H=1, pack `pack` elements
    # per group into the lane axis, zero-pad remaining lanes to 128.
    x1d = jnp.transpose(x, (0, 2, 1, 3)).reshape(B, n_freq, T)
    x1d = jnp.pad(x1d, ((0, b_pad - B), (0, 0), (0, 0)))
    xg = jnp.transpose(x1d.reshape(groups, pack, n_freq, T), (0, 2, 1, 3))
    xg = xg.reshape(groups, n_freq, pack * T)
    xg = jnp.pad(xg, ((0, 0), (0, 0), (0, W_PAD - pack * T)))

    l_pad = jnp.pad(l, ((0, b_pad - B), (0, 0)))

    layer_cfg = [
        dict(k=5, stride=1, pad=2, vin=T, vout=T),
        dict(k=4, stride=2, pad=1, vin=T, vout=T // 2),
        dict(k=4, stride=2, pad=1, vin=T // 2, vout=T // 4),
    ]

    def tap_valid(cfg):
        t = np.arange(T)[:, None]
        dk = np.arange(cfg["k"])[None, :]
        j = cfg["stride"] * t + dk - cfg["pad"]
        return ((j >= 0) & (j < cfg["vin"]) & (t < cfg["vout"])).astype(np.float32)

    def label_terms(wl, bias, cfg):
        # Label channels are constant over time -> wrapper-side einsum, folded
        # together with the conv bias, packed lane-dense per group.
        wl_r = wl.reshape(cfg["k"], -1, n_label)
        valid = jnp.asarray(tap_valid(cfg))                         # (T, k)
        lbl = jnp.einsum("kcn,bn,tk->bct", wl_r, l_pad, valid,
                         precision=lax.Precision.HIGHEST)
        lbl = lbl + bias[None, :, None]
        c = lbl.shape[1]
        lg = jnp.transpose(lbl.reshape(groups, pack, c, T), (0, 2, 1, 3))
        lg = lg.reshape(groups, c, pack * T)
        return jnp.pad(lg, ((0, 0), (0, 0), (0, W_PAD - pack * T)))

    lbl1 = label_terms(w1l, b1f, layer_cfg[0])
    lbl2 = label_terms(w2l, b2f, layer_cfg[1])
    lbl3 = label_terms(w3l, b3f, layer_cfg[2])

    def sel_mats(cfg):
        # Per-tap 0/1 selection: output lane (e*T + t) reads input lane
        # (e*T + stride*t + dk - pad) iff the source is a valid, same-element
        # input column.  Block-diagonal per packed element -> packed batches
        # stay independent; out-of-range / padded columns contribute zero.
        valid = tap_valid(cfg)
        mats = np.zeros((cfg["k"], W_PAD, W_PAD), np.float32)
        for e in range(pack):
            for t in range(cfg["vout"]):
                for dk in range(cfg["k"]):
                    if valid[t, dk]:
                        j = cfg["stride"] * t + dk - cfg["pad"]
                        mats[dk, e * T + j, e * T + t] = 1.0
        return jnp.asarray(mats)

    sel1 = sel_mats(layer_cfg[0])
    sel2 = sel_mats(layer_cfg[1])
    sel3 = sel_mats(layer_cfg[2])

    def const_spec(a):
        return pl.BlockSpec(a.shape, lambda g, _n=a.ndim: (0,) * _n)

    def group_spec(a):
        return pl.BlockSpec((1,) + a.shape[1:],
                            lambda g, _n=a.ndim: (g,) + (0,) * (_n - 1))

    out = pl.pallas_call(
        _encoder_kernel,
        out_shape=jax.ShapeDtypeStruct((groups, 2 * c3, W_PAD), jnp.float32),
        grid_spec=pltpu.PrefetchScalarGridSpec(
            num_scalar_prefetch=0,
            grid=(groups,),
            in_specs=[
                group_spec(xg),                                   # packed input
                group_spec(lbl1), group_spec(lbl2), group_spec(lbl3),
                const_spec(w1h), const_spec(w2h), const_spec(w3h),
                const_spec(sel1), const_spec(sel2), const_spec(sel3),
            ],
            out_specs=pl.BlockSpec((1, 2 * c3, W_PAD), lambda g: (g, 0, 0)),
        ),
        compiler_params=pltpu.CompilerParams(
            dimension_semantics=("parallel",)),
    )(xg, lbl1, lbl2, lbl3, w1h, w2h, w3h, sel1, sel2, sel3)

    # Unpack groups -> batch, slice the valid T//4 columns of each slot.
    t_out = T // 4
    o = out[:, :, :pack * T].reshape(groups, 2 * c3, pack, T)
    o = jnp.transpose(o, (0, 2, 1, 3)).reshape(b_pad, 2 * c3, T)[:B, :, :t_out]
    mu = o[:, :c3][:, :, None, :]
    logvar = o[:, c3:][:, :, None, :]
    return mu, logvar


# ----------------------------- pure-JAX reference -----------------------------

def _encoder_ref(x, l, params):
    def concat_xy(h, y):
        n_h, n_w = h.shape[2:4]
        yb = jnp.broadcast_to(y[:, :, None, None], (y.shape[0], y.shape[1], n_h, n_w))
        return jnp.concatenate([h, yb], axis=1)

    def conv(h, w, b, stride, pad):
        y = lax.conv_general_dilated(
            h, w, window_strides=(1, stride), padding=[(0, 0), (pad, pad)],
            dimension_numbers=("NCHW", "OIHW", "NCHW"),
            precision=lax.Precision.HIGHEST)
        return y + b[None, :, None, None]

    def bn(y, gamma, beta, mean, var):
        s = gamma / jnp.sqrt(var + BN_EPS)
        return (y - mean[None, :, None, None]) * s[None, :, None, None] \
            + beta[None, :, None, None]

    def gate(y):
        c = y.shape[1] // 2
        return y[:, :c] * jax.nn.sigmoid(y[:, c:])

    h = jnp.transpose(x, (0, 2, 1, 3))                       # '1D' permute
    h = gate(bn(conv(concat_xy(h, l), params["w1"], params["b1"], 1, 2), *params["bn1"]))
    h = gate(bn(conv(concat_xy(h, l), params["w2"], params["b2"], 2, 1), *params["bn2"]))
    h = conv(concat_xy(h, l), params["w3"], params["b3"], 2, 1)
    c = h.shape[1] // 2
    return h[:, :c], h[:, c:]


if __name__ == "__main__":
    B, n_freq, n_label, T = 4, 32, 4, 16
    c1, c2, c3 = n_freq // 2, n_freq // 4, n_freq // 8

    key = jax.random.PRNGKey(0)
    keys = jax.random.split(key, 10)

    def conv_w(k, shape):
        fan_in = shape[1] * shape[3]
        return jax.random.normal(k, shape, jnp.float32) / math.sqrt(fan_in)

    def bn_params(k, ch):
        kg, kb, km, kv = jax.random.split(k, 4)
        gamma = 1.0 + 0.1 * jax.random.normal(kg, (ch,), jnp.float32)
        beta = 0.1 * jax.random.normal(kb, (ch,), jnp.float32)
        mean = 0.1 * jax.random.normal(km, (ch,), jnp.float32)
        var = 1.0 + 0.5 * jnp.abs(jax.random.normal(kv, (ch,), jnp.float32))
        return gamma, beta, mean, var

    params = {
        "w1": conv_w(keys[0], (2 * c1, n_freq + n_label, 1, 5)),
        "b1": 0.1 * jax.random.normal(keys[1], (2 * c1,), jnp.float32),
        "bn1": bn_params(keys[2], 2 * c1),
        "w2": conv_w(keys[3], (2 * c2, c1 + n_label, 1, 4)),
        "b2": 0.1 * jax.random.normal(keys[4], (2 * c2,), jnp.float32),
        "bn2": bn_params(keys[5], 2 * c2),
        "w3": conv_w(keys[6], (2 * c3, c2 + n_label, 1, 4)),
        "b3": 0.1 * jax.random.normal(keys[7], (2 * c3,), jnp.float32),
    }

    x = jax.random.normal(keys[8], (B, 1, n_freq, T), jnp.float32)
    l = jax.random.normal(keys[9], (B, n_label), jnp.float32)

    mu, logvar = encoder_forward(x, l, params)
    jax.block_until_ready((mu, logvar))

    mu_ref, logvar_ref = _encoder_ref(x, l, params)
    assert mu.shape == (B, c3, 1, T // 4) and logvar.shape == (B, c3, 1, T // 4)
    assert jnp.allclose(mu, mu_ref, atol=2e-3, rtol=2e-3), \
        float(jnp.max(jnp.abs(mu - mu_ref)))
    assert jnp.allclose(logvar, logvar_ref, atol=2e-3, rtol=2e-3), \
        float(jnp.max(jnp.abs(logvar - logvar_ref)))

    print("KERNEL_OK")
</pallas_src>

<mosaic_0001>
module attributes {stable_mosaic.version = 11 : i64} {
  func.func @_encoder_kernel(%arg0: i32, %arg1: memref<1x32x128xf32, #tpu.memory_space<vmem>>, %arg2: memref<1x32x128xf32, #tpu.memory_space<vmem>>, %arg3: memref<1x16x128xf32, #tpu.memory_space<vmem>>, %arg4: memref<1x8x128xf32, #tpu.memory_space<vmem>>, %arg5: memref<160x32xf32, #tpu.memory_space<vmem>>, %arg6: memref<64x16xf32, #tpu.memory_space<vmem>>, %arg7: memref<32x8xf32, #tpu.memory_space<vmem>>, %arg8: memref<5x128x128xf32, #tpu.memory_space<vmem>>, %arg9: memref<4x128x128xf32, #tpu.memory_space<vmem>>, %arg10: memref<4x128x128xf32, #tpu.memory_space<vmem>>, %arg11: memref<1x8x128xf32, #tpu.memory_space<vmem>>) attributes {dimension_semantics = [#tpu.dimension_semantics<parallel>], iteration_bounds = array<i64: 2>, scalar_prefetch = 0 : i64, scratch_operands = 0 : i64, tpu.core_type = #tpu.core_type<tc>, window_params = [{transform_indices = @transform_0, window_bounds = array<i64: 1, 32, 128>}, {transform_indices = @transform_1, window_bounds = array<i64: 1, 32, 128>}, {transform_indices = @transform_2, window_bounds = array<i64: 1, 16, 128>}, {transform_indices = @transform_3, window_bounds = array<i64: 1, 8, 128>}, {pipeline_mode = #tpu.pipeline_mode<synchronous>, transform_indices = @transform_4, window_bounds = array<i64: 160, 32>}, {pipeline_mode = #tpu.pipeline_mode<synchronous>, transform_indices = @transform_5, window_bounds = array<i64: 64, 16>}, {pipeline_mode = #tpu.pipeline_mode<synchronous>, transform_indices = @transform_6, window_bounds = array<i64: 32, 8>}, {pipeline_mode = #tpu.pipeline_mode<synchronous>, transform_indices = @transform_7, window_bounds = array<i64: 5, 128, 128>}, {pipeline_mode = #tpu.pipeline_mode<synchronous>, transform_indices = @transform_8, window_bounds = array<i64: 4, 128, 128>}, {pipeline_mode = #tpu.pipeline_mode<synchronous>, transform_indices = @transform_9, window_bounds = array<i64: 4, 128, 128>}, {transform_indices = @transform_10, window_bounds = array<i64: 1, 8, 128>}]} {
    %c0 = arith.constant 0 : index
    %c0_0 = arith.constant 0 : index
    %c0_1 = arith.constant 0 : index
    %0 = vector.load %arg1[%c0, %c0_0, %c0_1] : memref<1x32x128xf32, #tpu.memory_space<vmem>>, vector<1x32x128xf32>
    %1 = vector.shape_cast %0 : vector<1x32x128xf32> to vector<32x128xf32>
    %c0_2 = arith.constant 0 : index
    %c0_3 = arith.constant 0 : index
    %c0_4 = arith.constant 0 : index
    %2 = vector.load %arg2[%c0_2, %c0_3, %c0_4] : memref<1x32x128xf32, #tpu.memory_space<vmem>>, vector<1x32x128xf32>
    %3 = vector.shape_cast %2 : vector<1x32x128xf32> to vector<32x128xf32>
    %c0_5 = arith.constant 0 : index
    %c0_6 = arith.constant 0 : index
    %4 = vector.load %arg5[%c0_5, %c0_6] : memref<160x32xf32, #tpu.memory_space<vmem>>, vector<160x32xf32>
    %cst = arith.constant dense<0.000000e+00> : vector<160x128xf32>
    %5 = tpu.matmul %4, %1, %cst {dimension_numbers = #tpu.dot_dimension_numbers<[1], [0], [0], [1], [0, 0, 1, 1], [], []>} : vector<160x32xf32>, vector<32x128xf32>, vector<160x128xf32> -> vector<160x128xf32>
    %6 = vector.extract_strided_slice %5 {offsets = [0, 0], sizes = [32, 128], strides = [1, 1]} : vector<160x128xf32> to vector<32x128xf32>
    %c0_7 = arith.constant 0 : index
    %c0_8 = arith.constant 0 : index
    %c0_9 = arith.constant 0 : index
    %7 = vector.load %arg8[%c0_7, %c0_8, %c0_9] : memref<5x128x128xf32, #tpu.memory_space<vmem>>, vector<1x128x128xf32>
    %8 = vector.shape_cast %7 : vector<1x128x128xf32> to vector<128x128xf32>
    %cst_10 = arith.constant dense<0.000000e+00> : vector<32x128xf32>
    %9 = tpu.matmul %6, %8, %cst_10 {dimension_numbers = #tpu.dot_dimension_numbers<[1], [0], [0], [1], [0, 0, 1, 1], [], []>} : vector<32x128xf32>, vector<128x128xf32>, vector<32x128xf32> -> vector<32x128xf32>
    %10 = arith.addf %3, %9 : vector<32x128xf32>
    %11 = vector.extract_strided_slice %5 {offsets = [32, 0], sizes = [32, 128], strides = [1, 1]} : vector<160x128xf32> to vector<32x128xf32>
    %c1 = arith.constant 1 : index
    %c0_11 = arith.constant 0 : index
    %c0_12 = arith.constant 0 : index
    %12 = vector.load %arg8[%c1, %c0_11, %c0_12] : memref<5x128x128xf32, #tpu.memory_space<vmem>>, vector<1x128x128xf32>
    %13 = vector.shape_cast %12 : vector<1x128x128xf32> to vector<128x128xf32>
    %cst_13 = arith.constant dense<0.000000e+00> : vector<32x128xf32>
    %14 = tpu.matmul %11, %13, %cst_13 {dimension_numbers = #tpu.dot_dimension_numbers<[1], [0], [0], [1], [0, 0, 1, 1], [], []>} : vector<32x128xf32>, vector<128x128xf32>, vector<32x128xf32> -> vector<32x128xf32>
    %15 = arith.addf %10, %14 : vector<32x128xf32>
    %16 = vector.extract_strided_slice %5 {offsets = [64, 0], sizes = [32, 128], strides = [1, 1]} : vector<160x128xf32> to vector<32x128xf32>
    %c2 = arith.constant 2 : index
    %c0_14 = arith.constant 0 : index
    %c0_15 = arith.constant 0 : index
    %17 = vector.load %arg8[%c2, %c0_14, %c0_15] : memref<5x128x128xf32, #tpu.memory_space<vmem>>, vector<1x128x128xf32>
    %18 = vector.shape_cast %17 : vector<1x128x128xf32> to vector<128x128xf32>
    %cst_16 = arith.constant dense<0.000000e+00> : vector<32x128xf32>
    %19 = tpu.matmul %16, %18, %cst_16 {dimension_numbers = #tpu.dot_dimension_numbers<[1], [0], [0], [1], [0, 0, 1, 1], [], []>} : vector<32x128xf32>, vector<128x128xf32>, vector<32x128xf32> -> vector<32x128xf32>
    %20 = arith.addf %15, %19 : vector<32x128xf32>
    %21 = vector.extract_strided_slice %5 {offsets = [96, 0], sizes = [32, 128], strides = [1, 1]} : vector<160x128xf32> to vector<32x128xf32>
    %c3 = arith.constant 3 : index
    %c0_17 = arith.constant 0 : index
    %c0_18 = arith.constant 0 : index
    %22 = vector.load %arg8[%c3, %c0_17, %c0_18] : memref<5x128x128xf32, #tpu.memory_space<vmem>>, vector<1x128x128xf32>
    %23 = vector.shape_cast %22 : vector<1x128x128xf32> to vector<128x128xf32>
    %cst_19 = arith.constant dense<0.000000e+00> : vector<32x128xf32>
    %24 = tpu.matmul %21, %23, %cst_19 {dimension_numbers = #tpu.dot_dimension_numbers<[1], [0], [0], [1], [0, 0, 1, 1], [], []>} : vector<32x128xf32>, vector<128x128xf32>, vector<32x128xf32> -> vector<32x128xf32>
    %25 = arith.addf %20, %24 : vector<32x128xf32>
    %26 = vector.extract_strided_slice %5 {offsets = [128, 0], sizes = [32, 128], strides = [1, 1]} : vector<160x128xf32> to vector<32x128xf32>
    %c4 = arith.constant 4 : index
    %c0_20 = arith.constant 0 : index
    %c0_21 = arith.constant 0 : index
    %27 = vector.load %arg8[%c4, %c0_20, %c0_21] : memref<5x128x128xf32, #tpu.memory_space<vmem>>, vector<1x128x128xf32>
    %28 = vector.shape_cast %27 : vector<1x128x128xf32> to vector<128x128xf32>
    %cst_22 = arith.constant dense<0.000000e+00> : vector<32x128xf32>
    %29 = tpu.matmul %26, %28, %cst_22 {dimension_numbers = #tpu.dot_dimension_numbers<[1], [0], [0], [1], [0, 0, 1, 1], [], []>} : vector<32x128xf32>, vector<128x128xf32>, vector<32x128xf32> -> vector<32x128xf32>
    %30 = arith.addf %25, %29 : vector<32x128xf32>
    %31 = vector.extract_strided_slice %30 {offsets = [0, 0], sizes = [16, 128], strides = [1, 1]} : vector<32x128xf32> to vector<16x128xf32>
    %32 = vector.extract_strided_slice %30 {offsets = [16, 0], sizes = [16, 128], strides = [1, 1]} : vector<32x128xf32> to vector<16x128xf32>
    %33 = arith.negf %32 : vector<16x128xf32>
    %34 = math.exp %33 : vector<16x128xf32>
    %cst_23 = arith.constant 1.000000e+00 : f32
    %35 = vector.broadcast %cst_23 : f32 to vector<16x128xf32>
    %36 = arith.addf %35, %34 : vector<16x128xf32>
    %37 = arith.divf %35, %36 : vector<16x128xf32>
    %38 = arith.mulf %31, %37 : vector<16x128xf32>
    %c0_24 = arith.constant 0 : index
    %c0_25 = arith.constant 0 : index
    %c0_26 = arith.constant 0 : index
    %39 = vector.load %arg3[%c0_24, %c0_25, %c0_26] : memref<1x16x128xf32, #tpu.memory_space<vmem>>, vector<1x16x128xf32>
    %40 = vector.shape_cast %39 : vector<1x16x128xf32> to vector<16x128xf32>
    %c0_27 = arith.constant 0 : index
    %c0_28 = arith.constant 0 : index
    %41 = vector.load %arg6[%c0_27, %c0_28] : memref<64x16xf32, #tpu.memory_space<vmem>>, vector<64x16xf32>
    %cst_29 = arith.constant dense<0.000000e+00> : vector<64x128xf32>
    %42 = tpu.matmul %41, %38, %cst_29 {dimension_numbers = #tpu.dot_dimension_numbers<[1], [0], [0], [1], [0, 0, 1, 1], [], []>} : vector<64x16xf32>, vector<16x128xf32>, vector<64x128xf32> -> vector<64x128xf32>
    %43 = vector.extract_strided_slice %42 {offsets = [0, 0], sizes = [16, 128], strides = [1, 1]} : vector<64x128xf32> to vector<16x128xf32>
    %c0_30 = arith.constant 0 : index
    %c0_31 = arith.constant 0 : index
    %c0_32 = arith.constant 0 : index
    %44 = vector.load %arg9[%c0_30, %c0_31, %c0_32] : memref<4x128x128xf32, #tpu.memory_space<vmem>>, vector<1x128x128xf32>
    %45 = vector.shape_cast %44 : vector<1x128x128xf32> to vector<128x128xf32>
    %cst_33 = arith.constant dense<0.000000e+00> : vector<16x128xf32>
    %46 = tpu.matmul %43, %45, %cst_33 {dimension_numbers = #tpu.dot_dimension_numbers<[1], [0], [0], [1], [0, 0, 1, 1], [], []>} : vector<16x128xf32>, vector<128x128xf32>, vector<16x128xf32> -> vector<16x128xf32>
    %47 = arith.addf %40, %46 : vector<16x128xf32>
    %48 = vector.extract_strided_slice %42 {offsets = [16, 0], sizes = [16, 128], strides = [1, 1]} : vector<64x128xf32> to vector<16x128xf32>
    %c1_34 = arith.constant 1 : index
    %c0_35 = arith.constant 0 : index
    %c0_36 = arith.constant 0 : index
    %49 = vector.load %arg9[%c1_34, %c0_35, %c0_36] : memref<4x128x128xf32, #tpu.memory_space<vmem>>, vector<1x128x128xf32>
    %50 = vector.shape_cast %49 : vector<1x128x128xf32> to vector<128x128xf32>
    %cst_37 = arith.constant dense<0.000000e+00> : vector<16x128xf32>
    %51 = tpu.matmul %48, %50, %cst_37 {dimension_numbers = #tpu.dot_dimension_numbers<[1], [0], [0], [1], [0, 0, 1, 1], [], []>} : vector<16x128xf32>, vector<128x128xf32>, vector<16x128xf32> -> vector<16x128xf32>
    %52 = arith.addf %47, %51 : vector<16x128xf32>
    %53 = vector.extract_strided_slice %42 {offsets = [32, 0], sizes = [16, 128], strides = [1, 1]} : vector<64x128xf32> to vector<16x128xf32>
    %c2_38 = arith.constant 2 : index
    %c0_39 = arith.constant 0 : index
    %c0_40 = arith.constant 0 : index
    %54 = vector.load %arg9[%c2_38, %c0_39, %c0_40] : memref<4x128x128xf32, #tpu.memory_space<vmem>>, vector<1x128x128xf32>
    %55 = vector.shape_cast %54 : vector<1x128x128xf32> to vector<128x128xf32>
    %cst_41 = arith.constant dense<0.000000e+00> : vector<16x128xf32>
    %56 = tpu.matmul %53, %55, %cst_41 {dimension_numbers = #tpu.dot_dimension_numbers<[1], [0], [0], [1], [0, 0, 1, 1], [], []>} : vector<16x128xf32>, vector<128x128xf32>, vector<16x128xf32> -> vector<16x128xf32>
    %57 = arith.addf %52, %56 : vector<16x128xf32>
    %58 = vector.extract_strided_slice %42 {offsets = [48, 0], sizes = [16, 128], strides = [1, 1]} : vector<64x128xf32> to vector<16x128xf32>
    %c3_42 = arith.constant 3 : index
    %c0_43 = arith.constant 0 : index
    %c0_44 = arith.constant 0 : index
    %59 = vector.load %arg9[%c3_42, %c0_43, %c0_44] : memref<4x128x128xf32, #tpu.memory_space<vmem>>, vector<1x128x128xf32>
    %60 = vector.shape_cast %59 : vector<1x128x128xf32> to vector<128x128xf32>
    %cst_45 = arith.constant dense<0.000000e+00> : vector<16x128xf32>
    %61 = tpu.matmul %58, %60, %cst_45 {dimension_numbers = #tpu.dot_dimension_numbers<[1], [0], [0], [1], [0, 0, 1, 1], [], []>} : vector<16x128xf32>, vector<128x128xf32>, vector<16x128xf32> -> vector<16x128xf32>
    %62 = arith.addf %57, %61 : vector<16x128xf32>
    %63 = vector.extract_strided_slice %62 {offsets = [0, 0], sizes = [8, 128], strides = [1, 1]} : vector<16x128xf32> to vector<8x128xf32>
    %64 = vector.extract_strided_slice %62 {offsets = [8, 0], sizes = [8, 128], strides = [1, 1]} : vector<16x128xf32> to vector<8x128xf32>
    %65 = arith.negf %64 : vector<8x128xf32>
    %66 = math.exp %65 : vector<8x128xf32>
    %cst_46 = arith.constant 1.000000e+00 : f32
    %67 = vector.broadcast %cst_46 : f32 to vector<8x128xf32>
    %68 = arith.addf %67, %66 : vector<8x128xf32>
    %69 = arith.divf %67, %68 : vector<8x128xf32>
    %70 = arith.mulf %63, %69 : vector<8x128xf32>
    %c0_47 = arith.constant 0 : index
    %c0_48 = arith.constant 0 : index
    %c0_49 = arith.constant 0 : index
    %71 = vector.load %arg4[%c0_47, %c0_48, %c0_49] : memref<1x8x128xf32, #tpu.memory_space<vmem>>, vector<1x8x128xf32>
    %72 = vector.shape_cast %71 : vector<1x8x128xf32> to vector<8x128xf32>
    %c0_50 = arith.constant 0 : index
    %c0_51 = arith.constant 0 : index
    %73 = vector.load %arg7[%c0_50, %c0_51] : memref<32x8xf32, #tpu.memory_space<vmem>>, vector<32x8xf32>
    %cst_52 = arith.constant dense<0.000000e+00> : vector<32x128xf32>
    %74 = tpu.matmul %73, %70, %cst_52 {dimension_numbers = #tpu.dot_dimension_numbers<[1], [0], [0], [1], [0, 0, 1, 1], [], []>} : vector<32x8xf32>, vector<8x128xf32>, vector<32x128xf32> -> vector<32x128xf32>
    %75 = vector.extract_strided_slice %74 {offsets = [0, 0], sizes = [8, 128], strides = [1, 1]} : vector<32x128xf32> to vector<8x128xf32>
    %c0_53 = arith.constant 0 : index
    %c0_54 = arith.constant 0 : index
    %c0_55 = arith.constant 0 : index
    %76 = vector.load %arg10[%c0_53, %c0_54, %c0_55] : memref<4x128x128xf32, #tpu.memory_space<vmem>>, vector<1x128x128xf32>
    %77 = vector.shape_cast %76 : vector<1x128x128xf32> to vector<128x128xf32>
    %cst_56 = arith.constant dense<0.000000e+00> : vector<8x128xf32>
    %78 = tpu.matmul %75, %77, %cst_56 {dimension_numbers = #tpu.dot_dimension_numbers<[1], [0], [0], [1], [0, 0, 1, 1], [], []>} : vector<8x128xf32>, vector<128x128xf32>, vector<8x128xf32> -> vector<8x128xf32>
    %79 = arith.addf %72, %78 : vector<8x128xf32>
    %80 = vector.extract_strided_slice %74 {offsets = [8, 0], sizes = [8, 128], strides = [1, 1]} : vector<32x128xf32> to vector<8x128xf32>
    %c1_57 = arith.constant 1 : index
    %c0_58 = arith.constant 0 : index
    %c0_59 = arith.constant 0 : index
    %81 = vector.load %arg10[%c1_57, %c0_58, %c0_59] : memref<4x128x128xf32, #tpu.memory_space<vmem>>, vector<1x128x128xf32>
    %82 = vector.shape_cast %81 : vector<1x128x128xf32> to vector<128x128xf32>
    %cst_60 = arith.constant dense<0.000000e+00> : vector<8x128xf32>
    %83 = tpu.matmul %80, %82, %cst_60 {dimension_numbers = #tpu.dot_dimension_numbers<[1], [0], [0], [1], [0, 0, 1, 1], [], []>} : vector<8x128xf32>, vector<128x128xf32>, vector<8x128xf32> -> vector<8x128xf32>
    %84 = arith.addf %79, %83 : vector<8x128xf32>
    %85 = vector.extract_strided_slice %74 {offsets = [16, 0], sizes = [8, 128], strides = [1, 1]} : vector<32x128xf32> to vector<8x128xf32>
    %c2_61 = arith.constant 2 : index
    %c0_62 = arith.constant 0 : index
    %c0_63 = arith.constant 0 : index
    %86 = vector.load %arg10[%c2_61, %c0_62, %c0_63] : memref<4x128x128xf32, #tpu.memory_space<vmem>>, vector<1x128x128xf32>
    %87 = vector.shape_cast %86 : vector<1x128x128xf32> to vector<128x128xf32>
    %cst_64 = arith.constant dense<0.000000e+00> : vector<8x128xf32>
    %88 = tpu.matmul %85, %87, %cst_64 {dimension_numbers = #tpu.dot_dimension_numbers<[1], [0], [0], [1], [0, 0, 1, 1], [], []>} : vector<8x128xf32>, vector<128x128xf32>, vector<8x128xf32> -> vector<8x128xf32>
    %89 = arith.addf %84, %88 : vector<8x128xf32>
    %90 = vector.extract_strided_slice %74 {offsets = [24, 0], sizes = [8, 128], strides = [1, 1]} : vector<32x128xf32> to vector<8x128xf32>
    %c3_65 = arith.constant 3 : index
    %c0_66 = arith.constant 0 : index
    %c0_67 = arith.constant 0 : index
    %91 = vector.load %arg10[%c3_65, %c0_66, %c0_67] : memref<4x128x128xf32, #tpu.memory_space<vmem>>, vector<1x128x128xf32>
    %92 = vector.shape_cast %91 : vector<1x128x128xf32> to vector<128x128xf32>
    %cst_68 = arith.constant dense<0.000000e+00> : vector<8x128xf32>
    %93 = tpu.matmul %90, %92, %cst_68 {dimension_numbers = #tpu.dot_dimension_numbers<[1], [0], [0], [1], [0, 0, 1, 1], [], []>} : vector<8x128xf32>, vector<128x128xf32>, vector<8x128xf32> -> vector<8x128xf32>
    %94 = arith.addf %89, %93 : vector<8x128xf32>
    %c0_69 = arith.constant 0 : index
    %c0_70 = arith.constant 0 : index
    %c0_71 = arith.constant 0 : index
    %95 = vector.load %arg11[%c0_69, %c0_70, %c0_71] : memref<1x8x128xf32, #tpu.memory_space<vmem>>, vector<1x8x128xf32>
    %96 = vector.shape_cast %95 : vector<1x8x128xf32> to vector<8x128xf32>
    %97 = vector.shape_cast %94 : vector<8x128xf32> to vector<1x8x128xf32>
    tpu.vector_store %arg11[%c0_69, %c0_70, %c0_71], %97 {strides = array<i32>} : memref<1x8x128xf32, #tpu.memory_space<vmem>>, vector<1x8x128xf32>,
    return
  }
  func.func @transform_0(%arg0: i32) -> (i32, i32, i32) {
    %c0_i32 = arith.constant 0 : i32
    %c0_i32_0 = arith.constant 0 : i32
    %c0_i32_1 = arith.constant 0 : i32
    return %arg0, %c0_i32, %c0_i32_0 : i32, i32, i32
  }
  func.func @transform_1(%arg0: i32) -> (i32, i32, i32) {
    %c0_i32 = arith.constant 0 : i32
    %c0_i32_0 = arith.constant 0 : i32
    %c0_i32_1 = arith.constant 0 : i32
    return %arg0, %c0_i32, %c0_i32_0 : i32, i32, i32
  }
  func.func @transform_2(%arg0: i32) -> (i32, i32, i32) {
    %c0_i32 = arith.constant 0 : i32
    %c0_i32_0 = arith.constant 0 : i32
    %c0_i32_1 = arith.constant 0 : i32
    return %arg0, %c0_i32, %c0_i32_0 : i32, i32, i32
  }
  func.func @transform_3(%arg0: i32) -> (i32, i32, i32) {
    %c0_i32 = arith.constant 0 : i32
    %c0_i32_0 = arith.constant 0 : i32
    %c0_i32_1 = arith.constant 0 : i32
    return %arg0, %c0_i32, %c0_i32_0 : i32, i32, i32
  }
  func.func @transform_4(%arg0: i32) -> (i32, i32) {
    %c0_i32 = arith.constant 0 : i32
    %c0_i32_0 = arith.constant 0 : i32
    %c0_i32_1 = arith.constant 0 : i32
    return %c0_i32, %c0_i32_0 : i32, i32
  }
  func.func @transform_5(%arg0: i32) -> (i32, i32) {
    %c0_i32 = arith.constant 0 : i32
    %c0_i32_0 = arith.constant 0 : i32
    %c0_i32_1 = arith.constant 0 : i32
    return %c0_i32, %c0_i32_0 : i32, i32
  }
  func.func @transform_6(%arg0: i32) -> (i32, i32) {
    %c0_i32 = arith.constant 0 : i32
    %c0_i32_0 = arith.constant 0 : i32
    %c0_i32_1 = arith.constant 0 : i32
    return %c0_i32, %c0_i32_0 : i32, i32
  }
  func.func @transform_7(%arg0: i32) -> (i32, i32, i32) {
    %c0_i32 = arith.constant 0 : i32
    %c0_i32_0 = arith.constant 0 : i32
    %c0_i32_1 = arith.constant 0 : i32
    %c0_i32_2 = arith.constant 0 : i32
    return %c0_i32, %c0_i32_0, %c0_i32_1 : i32, i32, i32
  }
  func.func @transform_8(%arg0: i32) -> (i32, i32, i32) {
    %c0_i32 = arith.constant 0 : i32
    %c0_i32_0 = arith.constant 0 : i32
    %c0_i32_1 = arith.constant 0 : i32
    %c0_i32_2 = arith.constant 0 : i32
    return %c0_i32, %c0_i32_0, %c0_i32_1 : i32, i32, i32
  }
  func.func @transform_9(%arg0: i32) -> (i32, i32, i32) {
    %c0_i32 = arith.constant 0 : i32
    %c0_i32_0 = arith.constant 0 : i32
    %c0_i32_1 = arith.constant 0 : i32
    %c0_i32_2 = arith.constant 0 : i32
    return %c0_i32, %c0_i32_0, %c0_i32_1 : i32, i32, i32
  }
  func.func @transform_10(%arg0: i32) -> (i32, i32, i32) {
    %c0_i32 = arith.constant 0 : i32
    %c0_i32_0 = arith.constant 0 : i32
    %c0_i32_1 = arith.constant 0 : i32
    return %arg0, %c0_i32, %c0_i32_0 : i32, i32, i32
  }
}

</mosaic_0001>

<llo_original>
// kernel: tpu_custom_call.1
$region0: #{tpu_custom_call.1}
  #allocation0 [shape = 'u32[]', space=smem, size = 0x4, offset = 0x4, fixed_abs, tag = 'smem constant byte address 0x4 - core index']
  #allocation1 [shape = 'u32[144,128]{1,0:T(1,128)}', space=vmem, size = 0x12000, scoped, tag = 'internal scratch']
  %s0 = inlined_call_operand.vmem [shape: f32[2,32,128], index: 0, kind: input, shape index: {}]
  %s1 = inlined_call_operand.vmem [shape: f32[2,32,128], index: 1, kind: input, shape index: {}]
  %s2 = inlined_call_operand.vmem [shape: f32[2,16,128], index: 2, kind: input, shape index: {}]
  %s3 = inlined_call_operand.vmem [shape: f32[2,8,128], index: 3, kind: input, shape index: {}]
  %s4 = inlined_call_operand.vmem [shape: f32[160,32], index: 4, kind: input, shape index: {}]
  %s5 = inlined_call_operand.vmem [shape: f32[64,16], index: 5, kind: input, shape index: {}]
  %s6 = inlined_call_operand.vmem [shape: f32[32,8], index: 6, kind: input, shape index: {}]
  %s7 = inlined_call_operand.hbm [shape: f32[5,128,128], index: 7, kind: input, shape index: {}]
  %s8 = inlined_call_operand.hbm [shape: f32[4,128,128], index: 8, kind: input, shape index: {}]
  %s9 = inlined_call_operand.hbm [shape: f32[4,128,128], index: 9, kind: input, shape index: {}]
  %s10 = inlined_call_operand.hbm [shape: f32[2,8,128], index: 10, kind: output, shape index: {}]
  %s11 = sld [smem:[#allocation0]]
  $region85: #{tpu_custom_call.1} parent=0
    _
  %s13 = ssub.s32 1, %s11
  %s14 = scalar_select 0, %s13, %s11
  $region1: #{tpu_custom_call.1} parent=0
    #allocation2 [shape = 'u8[327680]{0}', space=vmem, size = 0x50000, scoped, tag = 'input window, operand 7, single buffered']
    #allocation3 [shape = 's32[2]{0}', space=sflag, size = 0x8, scoped, tag = 'scoped memory for tpu_custom_call.1']
    #allocation4 [shape = 's32[2]{0}', space=sflag, size = 0x8, scoped, tag = 'scoped memory for tpu_custom_call.1']
    #allocation5 [shape = 'u8[262144]{0}', space=vmem, size = 0x40000, scoped, tag = 'input window, operand 8, single buffered']
    #allocation6 [shape = 's32[1]{0}', space=sflag, size = 0x4, scoped, tag = 'scoped memory for tpu_custom_call.1']
    #allocation7 [shape = 'u8[262144]{0}', space=vmem, size = 0x40000, scoped, tag = 'input window, operand 9, single buffered']
    #allocation8 [shape = 'u8[8192]{0}', space=vmem, size = 0x2000, scoped, tag = 'output window, operand 0']
    %15 = vsyncpa [#allocation3], 0
    %16 = vsyncpa [#allocation6], 0
    %17 = vsyncpa [#allocation4], 0
    %s18 = scalar_lea.sflag [#allocation4], 1
    %19 = vsyncpa %s18, 0
    loop: start=0, step=1, limit=4
    $region2: #{tpu_custom_call.1} parent=1 // loop_pre_header
      _
    $region3: #{tpu_custom_call.1} parent=1 // loop_header
      %s21 = sphi 0, %s25
      %p22 = scmp.ge.s32.totalorder %s21, 4
      %s31 = sphi 0, %s33
      %s34 = sphi 0, %s31
      %s35 = sphi 0, %s34
      %s51 = sphi 0, %s35
      %s57 = sphi 0, %s59
      %s60 = sphi 0, %s57
      %s61 = sphi 0, %s60
      %s77 = sphi 0, %s61
      %s83 = sphi 0, %s85
      %s86 = sphi 0, %s83
      %s87 = sphi 0, %s86
      %s103 = sphi 0, %s87
      %s109 = sphi 0, %s111
      %s112 = sphi 0, %s109
      %s113 = sphi 0, %s112
      %s129 = sphi 0, %s113
      %s133 = sphi 0, %s133
      %s135 = sphi 0, %s133
      %s136 = sphi 0, %s135
      %s150 = sphi 0, %s136
      %s154 = sphi 0, %s154
      %s156 = sphi 0, %s154
      %s157 = sphi 0, %s156
      %s171 = sphi 0, %s157
      %s175 = sphi 0, %s175
      %s177 = sphi 0, %s175
      %s178 = sphi 0, %s177
      %s192 = sphi 0, %s178
      %s196 = sphi 0, %s196
      %s198 = sphi 0, %s196
      %s199 = sphi 0, %s198
      %s213 = sphi 0, %s199
      %s217 = sphi 0, %s217
      %s219 = sphi 0, %s217
      %s220 = sphi 0, %s219
      %s234 = sphi 0, %s220
      %s238 = sphi 0, %s238
      %s240 = sphi 0, %s238
      %s241 = sphi 0, %s240
      %s255 = sphi 0, %s241
      %s261 = sphi 0, %s263
      %s264 = sphi 0, %s261
      %s265 = sphi 0, %s264
      %s281 = sphi 0, %s265
    $region4: #{tpu_custom_call.1} parent=1 // loop_header_branch
      %24 = sbr.rel (%p22) target = $region8
    $region5: #{tpu_custom_call.1} parent=1 // loop_body
      %s26 = ssub.s32 %s21, 1
      %s27 = ssub.s32 %s21, 2
      %s28 = sadd.s32 %s21, 1
      %s29 = ssub.s32 %s21, %s28
      %p30 = scmp.eq.s32.totalorder %s29, 0
      %s32 = sadd.s32 %s31, 1
      %s33 = scalar_select %p30, %s31, %s32
      %p36 = pneg %p30
      %p37 = scmp.eq.s32.totalorder %s21, 1
      %p38 = por %p36, %p37
      %p39 = scmp.ne.s32.totalorder %s31, %s34
      %p40 = scmp.eq.s32.totalorder %s21, 0
      %p41 = por %p39, %p40
      %p42 = scmp.ne.s32.totalorder %s31, %s34
      %p43 = scmp.eq.s32.totalorder %s26, 1
      %p44 = por %p42, %p43
      %p45 = scmp.ne.s32.totalorder %s34, %s35
      %p46 = scmp.eq.s32.totalorder %s26, 0
      %p47 = por %p45, %p46
      %p48 = scmp.ne.s32.totalorder %s34, %s35
      %p49 = scmp.eq.s32.totalorder %s27, 1
      %p50 = por %p48, %p49
      %p52 = scmp.ne.s32.totalorder %s35, %s51
      %p53 = scmp.eq.s32.totalorder %s27, 0
      %p54 = por %p52, %p53
      %s55 = ssub.s32 %s21, %s28
      %p56 = scmp.eq.s32.totalorder %s55, 0
      %s58 = sadd.s32 %s57, 1
      %s59 = scalar_select %p56, %s57, %s58
      %p62 = pneg %p56
      %p63 = scmp.eq.s32.totalorder %s21, 1
      %p64 = por %p62, %p63
      %p65 = scmp.ne.s32.totalorder %s57, %s60
      %p66 = scmp.eq.s32.totalorder %s21, 0
      %p67 = por %p65, %p66
      %p68 = scmp.ne.s32.totalorder %s57, %s60
      %p69 = scmp.eq.s32.totalorder %s26, 1
      %p70 = por %p68, %p69
      %p71 = scmp.ne.s32.totalorder %s60, %s61
      %p72 = scmp.eq.s32.totalorder %s26, 0
      %p73 = por %p71, %p72
      %p74 = scmp.ne.s32.totalorder %s60, %s61
      %p75 = scmp.eq.s32.totalorder %s27, 1
      %p76 = por %p74, %p75
      %p78 = scmp.ne.s32.totalorder %s61, %s77
      %p79 = scmp.eq.s32.totalorder %s27, 0
      %p80 = por %p78, %p79
      %s81 = ssub.s32 %s21, %s28
      %p82 = scmp.eq.s32.totalorder %s81, 0
      %s84 = sadd.s32 %s83, 1
      %s85 = scalar_select %p82, %s83, %s84
      %p88 = pneg %p82
      %p89 = scmp.eq.s32.totalorder %s21, 1
      %p90 = por %p88, %p89
      %p91 = scmp.ne.s32.totalorder %s83, %s86
      %p92 = scmp.eq.s32.totalorder %s21, 0
      %p93 = por %p91, %p92
      %p94 = scmp.ne.s32.totalorder %s83, %s86
      %p95 = scmp.eq.s32.totalorder %s26, 1
      %p96 = por %p94, %p95
      %p97 = scmp.ne.s32.totalorder %s86, %s87
      %p98 = scmp.eq.s32.totalorder %s26, 0
      %p99 = por %p97, %p98
      %p100 = scmp.ne.s32.totalorder %s86, %s87
      %p101 = scmp.eq.s32.totalorder %s27, 1
      %p102 = por %p100, %p101
      %p104 = scmp.ne.s32.totalorder %s87, %s103
      %p105 = scmp.eq.s32.totalorder %s27, 0
      %p106 = por %p104, %p105
      %s107 = ssub.s32 %s21, %s28
      %p108 = scmp.eq.s32.totalorder %s107, 0
      %s110 = sadd.s32 %s109, 1
      %s111 = scalar_select %p108, %s109, %s110
      %p114 = pneg %p108
      %p115 = scmp.eq.s32.totalorder %s21, 1
      %p116 = por %p114, %p115
      %p117 = scmp.ne.s32.totalorder %s109, %s112
      %p118 = scmp.eq.s32.totalorder %s21, 0
      %p119 = por %p117, %p118
      %p120 = scmp.ne.s32.totalorder %s109, %s112
      %p121 = scmp.eq.s32.totalorder %s26, 1
      %p122 = por %p120, %p121
      %p123 = scmp.ne.s32.totalorder %s112, %s113
      %p124 = scmp.eq.s32.totalorder %s26, 0
      %p125 = por %p123, %p124
      %p126 = scmp.ne.s32.totalorder %s112, %s113
      %p127 = scmp.eq.s32.totalorder %s27, 1
      %p128 = por %p126, %p127
      %p130 = scmp.ne.s32.totalorder %s113, %s129
      %p131 = scmp.eq.s32.totalorder %s27, 0
      %p132 = por %p130, %p131
      %s134 = sadd.s32 %s133, 1
      %p137 = scmp.eq.s32.totalorder %s21, 1
      %p138 = scmp.ne.s32.totalorder %s133, %s135
      %p139 = scmp.eq.s32.totalorder %s21, 0
      %p140 = por %p138, %p139
      %p141 = scmp.ne.s32.totalorder %s133, %s135
      %p142 = scmp.eq.s32.totalorder %s26, 1
      %p143 = por %p141, %p142
      %p144 = scmp.ne.s32.totalorder %s135, %s136
      %p145 = scmp.eq.s32.totalorder %s26, 0
      %p146 = por %p144, %p145
      %p147 = scmp.ne.s32.totalorder %s135, %s136
      %p148 = scmp.eq.s32.totalorder %s27, 1
      %p149 = por %p147, %p148
      %p151 = scmp.ne.s32.totalorder %s136, %s150
      %p152 = scmp.eq.s32.totalorder %s27, 0
      %p153 = por %p151, %p152
      %s155 = sadd.s32 %s154, 1
      %p158 = scmp.eq.s32.totalorder %s21, 1
      %p159 = scmp.ne.s32.totalorder %s154, %s156
      %p160 = scmp.eq.s32.totalorder %s21, 0
      %p161 = por %p159, %p160
      %p162 = scmp.ne.s32.totalorder %s154, %s156
      %p163 = scmp.eq.s32.totalorder %s26, 1
      %p164 = por %p162, %p163
      %p165 = scmp.ne.s32.totalorder %s156, %s157
      %p166 = scmp.eq.s32.totalorder %s26, 0
      %p167 = por %p165, %p166
      %p168 = scmp.ne.s32.totalorder %s156, %s157
      %p169 = scmp.eq.s32.totalorder %s27, 1
      %p170 = por %p168, %p169
      %p172 = scmp.ne.s32.totalorder %s157, %s171
      %p173 = scmp.eq.s32.totalorder %s27, 0
      %p174 = por %p172, %p173
      %s176 = sadd.s32 %s175, 1
      %p179 = scmp.eq.s32.totalorder %s21, 1
      %p180 = scmp.ne.s32.totalorder %s175, %s177
      %p181 = scmp.eq.s32.totalorder %s21, 0
      %p182 = por %p180, %p181
      %p183 = scmp.ne.s32.totalorder %s175, %s177
      %p184 = scmp.eq.s32.totalorder %s26, 1
      %p185 = por %p183, %p184
      %p186 = scmp.ne.s32.totalorder %s177, %s178
      %p187 = scmp.eq.s32.totalorder %s26, 0
      %p188 = por %p186, %p187
      %p189 = scmp.ne.s32.totalorder %s177, %s178
      %p190 = scmp.eq.s32.totalorder %s27, 1
      %p191 = por %p189, %p190
      %p193 = scmp.ne.s32.totalorder %s178, %s192
      %p194 = scmp.eq.s32.totalorder %s27, 0
      %p195 = por %p193, %p194
      %s197 = sadd.s32 %s196, 1
      %p200 = scmp.eq.s32.totalorder %s21, 1
      %p201 = scmp.ne.s32.totalorder %s196, %s198
      %p202 = scmp.eq.s32.totalorder %s21, 0
      %p203 = por %p201, %p202
      %p204 = scmp.ne.s32.totalorder %s196, %s198
      %p205 = scmp.eq.s32.totalorder %s26, 1
      %p206 = por %p204, %p205
      %p207 = scmp.ne.s32.totalorder %s198, %s199
      %p208 = scmp.eq.s32.totalorder %s26, 0
      %p209 = por %p207, %p208
      %p210 = scmp.ne.s32.totalorder %s198, %s199
      %p211 = scmp.eq.s32.totalorder %s27, 1
      %p212 = por %p210, %p211
      %p214 = scmp.ne.s32.totalorder %s199, %s213
      %p215 = scmp.eq.s32.totalorder %s27, 0
      %p216 = por %p214, %p215
      %s218 = sadd.s32 %s217, 1
      %p221 = scmp.eq.s32.totalorder %s21, 1
      %p222 = scmp.ne.s32.totalorder %s217, %s219
      %p223 = scmp.eq.s32.totalorder %s21, 0
      %p224 = por %p222, %p223
      %p225 = scmp.ne.s32.totalorder %s217, %s219
      %p226 = scmp.eq.s32.totalorder %s26, 1
      %p227 = por %p225, %p226
      %p228 = scmp.ne.s32.totalorder %s219, %s220
      %p229 = scmp.eq.s32.totalorder %s26, 0
      %p230 = por %p228, %p229
      %p231 = scmp.ne.s32.totalorder %s219, %s220
      %p232 = scmp.eq.s32.totalorder %s27, 1
      %p233 = por %p231, %p232
      %p235 = scmp.ne.s32.totalorder %s220, %s234
      %p236 = scmp.eq.s32.totalorder %s27, 0
      %p237 = por %p235, %p236
      %s239 = sadd.s32 %s238, 1
      %p242 = scmp.eq.s32.totalorder %s21, 1
      %p243 = scmp.ne.s32.totalorder %s238, %s240
      %p244 = scmp.eq.s32.totalorder %s21, 0
      %p245 = por %p243, %p244
      %p246 = scmp.ne.s32.totalorder %s238, %s240
      %p247 = scmp.eq.s32.totalorder %s26, 1
      %p248 = por %p246, %p247
      %p249 = scmp.ne.s32.totalorder %s240, %s241
      %p250 = scmp.eq.s32.totalorder %s26, 0
      %p251 = por %p249, %p250
      %p252 = scmp.ne.s32.totalorder %s240, %s241
      %p253 = scmp.eq.s32.totalorder %s27, 1
      %p254 = por %p252, %p253
      %p256 = scmp.ne.s32.totalorder %s241, %s255
      %p257 = scmp.eq.s32.totalorder %s27, 0
      %p258 = por %p256, %p257
      %s259 = ssub.s32 %s21, %s28
      %p260 = scmp.eq.s32.totalorder %s259, 0
      %s262 = sadd.s32 %s261, 1
      %s263 = scalar_select %p260, %s261, %s262
      %p266 = pneg %p260
      %p267 = scmp.eq.s32.totalorder %s21, 1
      %p268 = por %p266, %p267
      %p269 = scmp.ne.s32.totalorder %s261, %s264
      %p270 = scmp.eq.s32.totalorder %s21, 0
      %p271 = por %p269, %p270
      %p272 = scmp.ne.s32.totalorder %s261, %s264
      %p273 = scmp.eq.s32.totalorder %s26, 1
      %p274 = por %p272, %p273
      %p275 = scmp.ne.s32.totalorder %s264, %s265
      %p276 = scmp.eq.s32.totalorder %s26, 0
      %p277 = por %p275, %p276
      %p278 = scmp.ne.s32.totalorder %s264, %s265
      %p279 = scmp.eq.s32.totalorder %s27, 1
      %p280 = por %p278, %p279
      %p282 = scmp.ne.s32.totalorder %s265, %s281
      %p283 = scmp.eq.s32.totalorder %s27, 0
      %p284 = por %p282, %p283
      %p285 = scmp.le.s32.totalorder 1, %s21
      %p286 = scmp.lt.s32.totalorder %s21, 3
      %p287 = pnand %p285, %p286
      %p288 = pneg %p287
      // Predicated region
      $region9: #{tpu_custom_call.1} parent=5 // pred_check
        _
      $region10: #{tpu_custom_call.1} parent=5 // pred_check_branch
        %290 = sbr.rel (%p287) target = $region12
      $region11: #{tpu_custom_call.1} parent=5 // pred_region
        %s291 = ssub.s32 %s21, 1
        // Predicated region
        $region13: #{tpu_custom_call.1} parent=11 // pred_check
          %p292 = pneg %p146
        $region14: #{tpu_custom_call.1} parent=11 // pred_check_branch
          %294 = sbr.rel (%p292) target = $region16
        $region15: #{tpu_custom_call.1} parent=11 // pred_region
          _
        $region16: #{tpu_custom_call.1} parent=11 // pred_fallthru
          _
        // Predicated region
        $region17: #{tpu_custom_call.1} parent=11 // pred_check
          %p295 = pneg %p167
        $region18: #{tpu_custom_call.1} parent=11 // pred_check_branch
          %297 = sbr.rel (%p295) target = $region20
        $region19: #{tpu_custom_call.1} parent=11 // pred_region
          _
        $region20: #{tpu_custom_call.1} parent=11 // pred_fallthru
          _
        // Predicated region
        $region21: #{tpu_custom_call.1} parent=11 // pred_check
          %p298 = pneg %p188
        $region22: #{tpu_custom_call.1} parent=11 // pred_check_branch
          %300 = sbr.rel (%p298) target = $region24
        $region23: #{tpu_custom_call.1} parent=11 // pred_region
          _
        $region24: #{tpu_custom_call.1} parent=11 // pred_fallthru
          _
        // Predicated region
        $region25: #{tpu_custom_call.1} parent=11 // pred_check
          %p301 = pneg %p209
        $region26: #{tpu_custom_call.1} parent=11 // pred_check_branch
          %303 = sbr.rel (%p301) target = $region28
        $region27: #{tpu_custom_call.1} parent=11 // pred_region
          %s305 = ssub.s32 10240, 10240
          %306 = vsyncadd [#allocation3], %s305
          %s307 = sshll.u32 [#allocation2], 4
          %s308 = int_to_ptr.vmem [resolvable:$true] %s307
          %313 = dma.hbm_to_vmem [thread:$0]  %s7, 10240, %s308, [#allocation3], 128, 128, 8
        $region28: #{tpu_custom_call.1} parent=11 // pred_fallthru
          _
        // Predicated region
        $region29: #{tpu_custom_call.1} parent=11 // pred_check
          %p314 = pneg %p230
        $region30: #{tpu_custom_call.1} parent=11 // pred_check_branch
          %316 = sbr.rel (%p314) target = $region32
        $region31: #{tpu_custom_call.1} parent=11 // pred_region
          %s318 = ssub.s32 8192, 8192
          %319 = vsyncadd [#allocation6], %s318
          %s320 = sshll.u32 [#allocation5], 4
          %s321 = int_to_ptr.vmem [resolvable:$true] %s320
          %326 = dma.hbm_to_vmem [thread:$0]  %s8, 8192, %s321, [#allocation6], 128, 128, 8
        $region32: #{tpu_custom_call.1} parent=11 // pred_fallthru
          _
        // Predicated region
        $region33: #{tpu_custom_call.1} parent=11 // pred_check
          %p327 = pneg %p251
        $region34: #{tpu_custom_call.1} parent=11 // pred_check_branch
          %329 = sbr.rel (%p327) target = $region36
        $region35: #{tpu_custom_call.1} parent=11 // pred_region
          %s331 = ssub.s32 8192, 8192
          %332 = vsyncadd [#allocation6], %s331
          %s333 = sshll.u32 [#allocation7], 4
          %s334 = int_to_ptr.vmem [resolvable:$true] %s333
          %339 = dma.hbm_to_vmem [thread:$0]  %s9, 8192, %s334, [#allocation6], 128, 128, 8
        $region36: #{tpu_custom_call.1} parent=11 // pred_fallthru
          _
      $region12: #{tpu_custom_call.1} parent=5 // pred_fallthru
        _
      %p340 = scmp.lt.s32.totalorder %s21, 2
      // Predicated region
      $region37: #{tpu_custom_call.1} parent=5 // pred_check
        %p341 = pneg %p340
      $region38: #{tpu_custom_call.1} parent=5 // pred_check_branch
        %343 = sbr.rel (%p341) target = $region40
      $region39: #{tpu_custom_call.1} parent=5 // pred_region
        // Predicated region
        $region41: #{tpu_custom_call.1} parent=39 // pred_check
          %p344 = pneg %p41
        $region42: #{tpu_custom_call.1} parent=39 // pred_check_branch
          %346 = sbr.rel (%p344) target = $region44
        $region43: #{tpu_custom_call.1} parent=39 // pred_region
          %p347 = scmp.lt.s32.totalorder %s21, 1
          %s348 = scalar_select %p347, %s21, 1
          %s349 = smul.addr %s348, 4
          %s350 = smul.addr %s349, 8
          %s351 = scalar_lea.vmem %s0, %s350
        $region44: #{tpu_custom_call.1} parent=39 // pred_fallthru
          _
        // Predicated region
        $region45: #{tpu_custom_call.1} parent=39 // pred_check
          %p352 = pneg %p67
        $region46: #{tpu_custom_call.1} parent=39 // pred_check_branch
          %354 = sbr.rel (%p352) target = $region48
        $region47: #{tpu_custom_call.1} parent=39 // pred_region
          %p355 = scmp.lt.s32.totalorder %s21, 1
          %s356 = scalar_select %p355, %s21, 1
          %s357 = smul.addr %s356, 4
          %s358 = smul.addr %s357, 8
          %s359 = scalar_lea.vmem %s1, %s358
        $region48: #{tpu_custom_call.1} parent=39 // pred_fallthru
          _
        // Predicated region
        $region49: #{tpu_custom_call.1} parent=39 // pred_check
          %p360 = pneg %p93
        $region50: #{tpu_custom_call.1} parent=39 // pred_check_branch
          %362 = sbr.rel (%p360) target = $region52
        $region51: #{tpu_custom_call.1} parent=39 // pred_region
          %p363 = scmp.lt.s32.totalorder %s21, 1
          %s364 = scalar_select %p363, %s21, 1
          %s365 = smul.addr %s364, 2
          %s366 = smul.addr %s365, 8
          %s367 = scalar_lea.vmem %s2, %s366
        $region52: #{tpu_custom_call.1} parent=39 // pred_fallthru
          _
        // Predicated region
        $region53: #{tpu_custom_call.1} parent=39 // pred_check
          %p368 = pneg %p119
        $region54: #{tpu_custom_call.1} parent=39 // pred_check_branch
          %370 = sbr.rel (%p368) target = $region56
        $region55: #{tpu_custom_call.1} parent=39 // pred_region
          %p371 = scmp.lt.s32.totalorder %s21, 1
          %s372 = scalar_select %p371, %s21, 1
          %s373 = smul.addr %s372, 8
          %s374 = scalar_lea.vmem %s3, %s373
        $region56: #{tpu_custom_call.1} parent=39 // pred_fallthru
          _
      $region40: #{tpu_custom_call.1} parent=5 // pred_fallthru
        _
      %p375 = scmp.le.s32.totalorder 1, %s21
      %p376 = scmp.lt.s32.totalorder %s21, 3
      %p377 = pnand %p375, %p376
      %p378 = pneg %p377
      // Predicated region
      $region57: #{tpu_custom_call.1} parent=5 // pred_check
        _
      $region58: #{tpu_custom_call.1} parent=5 // pred_check_branch
        %380 = sbr.rel (%p377) target = $region60
      $region59: #{tpu_custom_call.1} parent=5 // pred_region
        %s381 = ssub.s32 %s21, 1
        // Predicated region
        $region61: #{tpu_custom_call.1} parent=59 // pred_check
          %p382 = pneg %p209
        $region62: #{tpu_custom_call.1} parent=59 // pred_check_branch
          %384 = sbr.rel (%p382) target = $region64
        $region63: #{tpu_custom_call.1} parent=59 // pred_region
          %385 = dma.done [#allocation3], 10240
        $region64: #{tpu_custom_call.1} parent=59 // pred_fallthru
          _
        // Predicated region
        $region65: #{tpu_custom_call.1} parent=59 // pred_check
          %p386 = pneg %p230
        $region66: #{tpu_custom_call.1} parent=59 // pred_check_branch
          %388 = sbr.rel (%p386) target = $region68
        $region67: #{tpu_custom_call.1} parent=59 // pred_region
          %389 = dma.done [#allocation6], 8192
        $region68: #{tpu_custom_call.1} parent=59 // pred_fallthru
          _
        // Predicated region
        $region69: #{tpu_custom_call.1} parent=59 // pred_check
          %p390 = pneg %p251
        $region70: #{tpu_custom_call.1} parent=59 // pred_check_branch
          %392 = sbr.rel (%p390) target = $region72
        $region71: #{tpu_custom_call.1} parent=59 // pred_region
          %393 = dma.done [#allocation6], 8192
        $region72: #{tpu_custom_call.1} parent=59 // pred_fallthru
          _
        %p394 = scmp.lt.s32.totalorder %s26, 1
        %s395 = scalar_select %p394, %s26, 1
        %s396 = smul.addr %s395, 4
        %s397 = smul.addr %s396, 8
        %s398 = scalar_lea.vmem %s0, %s397
        %p399 = pneg %p47
        %p400 = pneg %p44
        %p401 = scmp.lt.s32.totalorder %s26, 1
        %s402 = scalar_select %p401, %s26, 1
        %s403 = smul.addr %s402, 4
        %s404 = smul.addr %s403, 8
        %s405 = scalar_lea.vmem %s1, %s404
        %p406 = pneg %p73
        %p407 = pneg %p70
        %p408 = scmp.lt.s32.totalorder %s26, 1
        %s409 = scalar_select %p408, %s26, 1
        %s410 = smul.addr %s409, 2
        %s411 = smul.addr %s410, 8
        %s412 = scalar_lea.vmem %s2, %s411
        %p413 = pneg %p99
        %p414 = pneg %p96
        %p415 = scmp.lt.s32.totalorder %s26, 1
        %s416 = scalar_select %p415, %s26, 1
        %s417 = smul.addr %s416, 8
        %s418 = scalar_lea.vmem %s3, %s417
        %p419 = pneg %p125
        %p420 = pneg %p122
        %p421 = pneg %p146
        %p422 = pneg %p143
        %p423 = pneg %p167
        %p424 = pneg %p164
        %p425 = pneg %p188
        %p426 = pneg %p185
        %p427 = pneg %p209
        %p428 = pneg %p206
        %p429 = pneg %p230
        %p430 = pneg %p227
        %p431 = pneg %p251
        %p432 = pneg %p248
        %p433 = pneg %p277
        %p434 = pneg %p274
        %s435 = sand.u32 %s264, 1
        %s436 = scalar_lea.sflag [#allocation4], %s435
        %s437 = sand.u32 %s264, 1
        %s438 = smul.addr %s437, 8
        %s439 = scalar_lea.vmem [#allocation8], %s438
        %p440 = scmp.lt.s32.totalorder %s26, 1
        %s441 = scalar_select %p440, %s26, 1
        %s442 = smul.addr %s441, 4
        %s443 = smul.addr %s442, 8
        %s444 = scalar_lea.vmem %s0, %s443
        %p445 = scmp.lt.s32.totalorder %s26, 1
        %s446 = scalar_select %p445, %s26, 1
        %s447 = smul.addr %s446, 4
        %s448 = smul.addr %s447, 8
        %s449 = scalar_lea.vmem %s1, %s448
        %p450 = scmp.lt.s32.totalorder %s26, 1
        %s451 = scalar_select %p450, %s26, 1
        %s452 = smul.addr %s451, 2
        %s453 = smul.addr %s452, 8
        %s454 = scalar_lea.vmem %s2, %s453
        %p455 = scmp.lt.s32.totalorder %s26, 1
        %s456 = scalar_select %p455, %s26, 1
        %s457 = smul.addr %s456, 8
        %s458 = scalar_lea.vmem %s3, %s457
        %v459 = vld [vmem:[%s444] sm:$0xff]
        %v460 = vld [vmem:[%s444 + $0x8] sm:$0xff]
        %v461 = vld [vmem:[%s444 + $0x10] sm:$0xff]
        %v462 = vld [vmem:[%s444 + $0x18] sm:$0xff]
        %v463 = vld [vmem:[%s449] sm:$0xff]
        %v464 = vld [vmem:[%s449 + $0x8] sm:$0xff]
        %v465 = vld [vmem:[%s449 + $0x10] sm:$0xff]
        %v466 = vld [vmem:[%s449 + $0x18] sm:$0xff]
        %v467 = vld [vmem:[%s4] sm:$0xff]
        %v468 = vld [vmem:[%s4 + $0x8] sm:$0xff]
        %v469 = vld [vmem:[%s4 + $0x10] sm:$0xff]
        %v470 = vld [vmem:[%s4 + $0x18] sm:$0xff]
        %v471 = vld [vmem:[%s4 + $0x20] sm:$0xff]
        %v472 = vld [vmem:[%s4 + $0x28] sm:$0xff]
        %v473 = vld [vmem:[%s4 + $0x30] sm:$0xff]
        %v474 = vld [vmem:[%s4 + $0x38] sm:$0xff]
        %v475 = vld [vmem:[%s4 + $0x40] sm:$0xff]
        %v476 = vld [vmem:[%s4 + $0x48] sm:$0xff]
        %v477 = vld [vmem:[%s4 + $0x50] sm:$0xff]
        %v478 = vld [vmem:[%s4 + $0x58] sm:$0xff]
        %v479 = vld [vmem:[%s4 + $0x60] sm:$0xff]
        %v480 = vld [vmem:[%s4 + $0x68] sm:$0xff]
        %v481 = vld [vmem:[%s4 + $0x70] sm:$0xff]
        %v482 = vld [vmem:[%s4 + $0x78] sm:$0xff]
        %v483 = vld [vmem:[%s4 + $0x80] sm:$0xff]
        %v484 = vld [vmem:[%s4 + $0x88] sm:$0xff]
        %v485 = vld [vmem:[%s4 + $0x90] sm:$0xff]
        %v486 = vld [vmem:[%s4 + $0x98] sm:$0xff]
        %vm487 = vcmask 261120
        %v489 = vsel %vm487, %v467, 0
        %v492 = vsel %vm487, %v468, 0
        %v495 = vsel %vm487, %v469, 0
        %v498 = vsel %vm487, %v470, 0
        %v501 = vsel %vm487, %v471, 0
        %v504 = vsel %vm487, %v472, 0
        %v507 = vsel %vm487, %v473, 0
        %v510 = vsel %vm487, %v474, 0
        %v513 = vsel %vm487, %v475, 0
        %v516 = vsel %vm487, %v476, 0
        %v519 = vsel %vm487, %v477, 0
        %v522 = vsel %vm487, %v478, 0
        %v525 = vsel %vm487, %v479, 0
        %v528 = vsel %vm487, %v480, 0
        %v531 = vsel %vm487, %v481, 0
        %v534 = vsel %vm487, %v482, 0
        %v537 = vsel %vm487, %v483, 0
        %v540 = vsel %vm487, %v484, 0
        %v543 = vsel %vm487, %v485, 0
        %v546 = vsel %vm487, %v486, 0
        %548 = vmatprep.subr.mxu0 0.0
        %549 = vmatpush1.msra.mxu0 0.0
        %550 = vmatprep.subr.mxu0 0.0
        %551 = vmatpush1.msra.mxu0 0.0
        %552 = vmatprep.subr.mxu0 0.0
        %553 = vmatpush1.msra.mxu0 0.0
        %554 = vmatprep.subr.mxu0 0.0
        %555 = vmatpush1.msra.mxu0 0.0
        %556 = vmatprep.subr.mxu0 0.0
        %557 = vmatpush1.msra.mxu0 0.0
        %558 = vmatprep.subr.mxu0 0.0
        %559 = vmatpush1.msra.mxu0 0.0
        %560 = vmatprep.subr.mxu0 0.0
        %561 = vmatpush1.msra.mxu0 0.0
        %562 = vmatprep.subr.mxu0 0.0
        %563 = vmatpush1.msra.mxu0 0.0
        %564 = vmatprep.subr.mxu0 0.0
        %565 = vmatpush1.msra.mxu0 0.0
        %566 = vmatprep.subr.mxu0 0.0
        %567 = vmatpush1.msra.mxu0 0.0
        %568 = vmatprep.subr.mxu0 0.0
        %569 = vmatpush1.msra.mxu0 0.0
        %570 = vmatprep.subr.mxu0 0.0
        %571 = vmatpush1.msra.mxu0 0.0
        %572 = vmatprep.subr.mxu0 0.0
        %573 = vmatpush1.msra.mxu0 %v462
        %574 = vmatprep.subr.mxu0 0.0
        %575 = vmatpush1.msra.mxu0 %v461
        %576 = vmatprep.subr.mxu0 0.0
        %577 = vmatpush1.msra.mxu0 %v460
        %578 = vmatprep.subr.mxu0 0.0
        %579 = vmatpush1.msra.mxu0 %v459
        %580 = vmatprep.subr.mxu0 0.0
        %581 = vmatpush2.msra.mxu0 0.0
        %582 = vmatprep.subr.mxu0 0.0
        %583 = vmatpush2.msra.mxu0 0.0
        %584 = vmatprep.subr.mxu0 0.0
        %585 = vmatpush2.msra.mxu0 0.0
        %586 = vmatprep.subr.mxu0 0.0
        %587 = vmatpush2.msra.mxu0 0.0
        %588 = vmatprep.subr.mxu0 0.0
        %589 = vmatpush2.msra.mxu0 0.0
        %590 = vmatprep.subr.mxu0 0.0
        %591 = vmatpush2.msra.mxu0 0.0
        %592 = vmatprep.subr.mxu0 0.0
        %593 = vmatpush2.msra.mxu0 0.0
        %594 = vmatprep.subr.mxu0 0.0
        %595 = vmatpush2.msra.mxu0 0.0
        %596 = vmatprep.subr.mxu0 0.0
        %597 = vmatpush2.msra.mxu0 0.0
        %598 = vmatprep.subr.mxu0 0.0
        %599 = vmatpush2.msra.mxu0 0.0
        %600 = vmatprep.subr.mxu0 0.0
        %601 = vmatpush2.msra.mxu0 0.0
        %602 = vmatprep.subr.mxu0 0.0
        %603 = vmatpush2.msra.mxu0 0.0
        %604 = vmatprep.subr.mxu0 0.0
        %605 = vmatpush2.msra.mxu0 0.0
        %606 = vmatprep.subr.mxu0 0.0
        %607 = vmatpush2.msra.mxu0 0.0
        %608 = vmatprep.subr.mxu0 0.0
        %609 = vmatpush2.msra.mxu0 0.0
        %610 = vmatprep.subr.mxu0 0.0
        %611 = vmatpush2.msra.mxu0 0.0
        %612 = vmatprep.mubr.f32.mxu0 0.0
        %613 = vmatmul.mubr.f32.gmra.mxu0 %v489
        %v614 = vpop.f32.mrf.mxu0
        %v615 = vadd.f32 0.0, %v614
        %v616 = vpop.f32.mrf.mxu0
        %617 = vmatprep.mubr.f32.mxu0 0.0
        %618 = vmatmul.mubr.f32.gmra.mxu0 %v492
        %v619 = vpop.f32.mrf.mxu0
        %v620 = vadd.f32 0.0, %v619
        %v621 = vpop.f32.mrf.mxu0
        %622 = vmatprep.mubr.f32.mxu0 0.0
        %623 = vmatmul.mubr.f32.gmra.mxu0 %v495
        %v624 = vpop.f32.mrf.mxu0
        %v625 = vadd.f32 0.0, %v624
        %v626 = vpop.f32.mrf.mxu0
        %627 = vmatprep.mubr.f32.mxu0 0.0
        %628 = vmatmul.mubr.f32.gmra.mxu0 %v498
        %v629 = vpop.f32.mrf.mxu0
        %v630 = vadd.f32 0.0, %v629
        %v631 = vpop.f32.mrf.mxu0
        %632 = vmatprep.mubr.f32.mxu0 0.0
        %633 = vmatmul.mubr.f32.gmra.mxu0 %v501
        %v634 = vpop.f32.mrf.mxu0
        %v635 = vadd.f32 0.0, %v634
        %v636 = vpop.f32.mrf.mxu0
        %637 = vmatprep.mubr.f32.mxu0 0.0
        %638 = vmatmul.mubr.f32.gmra.mxu0 %v504
        %v639 = vpop.f32.mrf.mxu0
        %v640 = vadd.f32 0.0, %v639
        %v641 = vpop.f32.mrf.mxu0
        %642 = vmatprep.mubr.f32.mxu0 0.0
        %643 = vmatmul.mubr.f32.gmra.mxu0 %v507
        %v644 = vpop.f32.mrf.mxu0
        %v645 = vadd.f32 0.0, %v644
        %v646 = vpop.f32.mrf.mxu0
        %647 = vmatprep.mubr.f32.mxu0 0.0
        %648 = vmatmul.mubr.f32.gmra.mxu0 %v510
        %v649 = vpop.f32.mrf.mxu0
        %v650 = vadd.f32 0.0, %v649
        %v651 = vpop.f32.mrf.mxu0
        %652 = vmatprep.mubr.f32.mxu0 0.0
        %653 = vmatmul.mubr.f32.gmra.mxu0 %v513
        %v654 = vpop.f32.mrf.mxu0
        %v655 = vadd.f32 0.0, %v654
        %v656 = vpop.f32.mrf.mxu0
        %657 = vmatprep.mubr.f32.mxu0 0.0
        %658 = vmatmul.mubr.f32.gmra.mxu0 %v516
        %v659 = vpop.f32.mrf.mxu0
        %v660 = vadd.f32 0.0, %v659
        %v661 = vpop.f32.mrf.mxu0
        %662 = vmatprep.mubr.f32.mxu0 0.0
        %663 = vmatmul.mubr.f32.gmra.mxu0 %v519
        %v664 = vpop.f32.mrf.mxu0
        %v665 = vadd.f32 0.0, %v664
        %v666 = vpop.f32.mrf.mxu0
        %667 = vmatprep.mubr.f32.mxu0 0.0
        %668 = vmatmul.mubr.f32.gmra.mxu0 %v522
        %v669 = vpop.f32.mrf.mxu0
        %v670 = vadd.f32 0.0, %v669
        %v671 = vpop.f32.mrf.mxu0
        %672 = vmatprep.mubr.f32.mxu0 0.0
        %673 = vmatmul.mubr.f32.gmra.mxu0 %v525
        %v674 = vpop.f32.mrf.mxu0
        %v675 = vadd.f32 0.0, %v674
        %v676 = vpop.f32.mrf.mxu0
        %677 = vmatprep.mubr.f32.mxu0 0.0
        %678 = vmatmul.mubr.f32.gmra.mxu0 %v528
        %v679 = vpop.f32.mrf.mxu0
        %v680 = vadd.f32 0.0, %v679
        %v681 = vpop.f32.mrf.mxu0
        %682 = vmatprep.mubr.f32.mxu0 0.0
        %683 = vmatmul.mubr.f32.gmra.mxu0 %v531
        %v684 = vpop.f32.mrf.mxu0
        %v685 = vadd.f32 0.0, %v684
        %v686 = vpop.f32.mrf.mxu0
        %687 = vmatprep.mubr.f32.mxu0 0.0
        %688 = vmatmul.mubr.f32.gmra.mxu0 %v534
        %v689 = vpop.f32.mrf.mxu0
        %v690 = vadd.f32 0.0, %v689
        %v691 = vpop.f32.mrf.mxu0
        %692 = vmatprep.mubr.f32.mxu0 0.0
        %693 = vmatmul.mubr.f32.gmra.mxu0 %v537
        %v694 = vpop.f32.mrf.mxu0
        %v695 = vadd.f32 0.0, %v694
        %v696 = vpop.f32.mrf.mxu0
        %697 = vmatprep.mubr.f32.mxu0 0.0
        %698 = vmatmul.mubr.f32.gmra.mxu0 %v540
        %v699 = vpop.f32.mrf.mxu0
        %v700 = vadd.f32 0.0, %v699
        %v701 = vpop.f32.mrf.mxu0
        %702 = vmatprep.mubr.f32.mxu0 0.0
        %703 = vmatmul.mubr.f32.gmra.mxu0 %v543
        %v704 = vpop.f32.mrf.mxu0
        %v705 = vadd.f32 0.0, %v704
        %v706 = vpop.f32.mrf.mxu0
        %707 = vmatprep.mubr.f32.mxu0 0.0
        %708 = vmatmul.mubr.f32.gmra.mxu0 %v546
        %v709 = vpop.f32.mrf.mxu0
        %v710 = vadd.f32 0.0, %v709
        %v711 = vpop.f32.mrf.mxu0
        %712 = vdwg.mxu0
        %v713 = vld [vmem:[#allocation2] sm:$0xff]
        %v714 = vld [vmem:[#allocation2 + $0x8] sm:$0xff]
        %v715 = vld [vmem:[#allocation2 + $0x10] sm:$0xff]
        %v716 = vld [vmem:[#allocation2 + $0x18] sm:$0xff]
        %v717 = vld [vmem:[#allocation2 + $0x20] sm:$0xff]
        %v718 = vld [vmem:[#allocation2 + $0x28] sm:$0xff]
        %v719 = vld [vmem:[#allocation2 + $0x30] sm:$0xff]
        %v720 = vld [vmem:[#allocation2 + $0x38] sm:$0xff]
        %v721 = vld [vmem:[#allocation2 + $0x40] sm:$0xff]
        %v722 = vld [vmem:[#allocation2 + $0x48] sm:$0xff]
        %v723 = vld [vmem:[#allocation2 + $0x50] sm:$0xff]
        %v724 = vld [vmem:[#allocation2 + $0x58] sm:$0xff]
        %v725 = vld [vmem:[#allocation2 + $0x60] sm:$0xff]
        %v726 = vld [vmem:[#allocation2 + $0x68] sm:$0xff]
        %v727 = vld [vmem:[#allocation2 + $0x70] sm:$0xff]
        %v728 = vld [vmem:[#allocation2 + $0x78] sm:$0xff]
        %729 = vmatprep.subr.mxu0 0.0
        %730 = vmatpush1.msra.mxu0 %v728
        %731 = vmatprep.subr.mxu0 0.0
        %732 = vmatpush1.msra.mxu0 %v727
        %733 = vmatprep.subr.mxu0 0.0
        %734 = vmatpush1.msra.mxu0 %v726
        %735 = vmatprep.subr.mxu0 0.0
        %736 = vmatpush1.msra.mxu0 %v725
        %737 = vmatprep.subr.mxu0 0.0
        %738 = vmatpush1.msra.mxu0 %v724
        %739 = vmatprep.subr.mxu0 0.0
        %740 = vmatpush1.msra.mxu0 %v723
        %741 = vmatprep.subr.mxu0 0.0
        %742 = vmatpush1.msra.mxu0 %v722
        %743 = vmatprep.subr.mxu0 0.0
        %744 = vmatpush1.msra.mxu0 %v721
        %745 = vmatprep.subr.mxu0 0.0
        %746 = vmatpush1.msra.mxu0 %v720
        %747 = vmatprep.subr.mxu0 0.0
        %748 = vmatpush1.msra.mxu0 %v719
        %749 = vmatprep.subr.mxu0 0.0
        %750 = vmatpush1.msra.mxu0 %v718
        %751 = vmatprep.subr.mxu0 0.0
        %752 = vmatpush1.msra.mxu0 %v717
        %753 = vmatprep.subr.mxu0 0.0
        %754 = vmatpush1.msra.mxu0 %v716
        %755 = vmatprep.subr.mxu0 0.0
        %756 = vmatpush1.msra.mxu0 %v715
        %757 = vmatprep.subr.mxu0 0.0
        %758 = vmatpush1.msra.mxu0 %v714
        %759 = vmatprep.subr.mxu0 0.0
        %760 = vmatpush1.msra.mxu0 %v713
        %761 = vmatprep.subr.mxu0 0.0
        %762 = vmatpush2.msra.mxu0 0.0
        %763 = vmatprep.subr.mxu0 0.0
        %764 = vmatpush2.msra.mxu0 0.0
        %765 = vmatprep.subr.mxu0 0.0
        %766 = vmatpush2.msra.mxu0 0.0
        %767 = vmatprep.subr.mxu0 0.0
        %768 = vmatpush2.msra.mxu0 0.0
        %769 = vmatprep.subr.mxu0 0.0
        %770 = vmatpush2.msra.mxu0 0.0
        %771 = vmatprep.subr.mxu0 0.0
        %772 = vmatpush2.msra.mxu0 0.0
        %773 = vmatprep.subr.mxu0 0.0
        %774 = vmatpush2.msra.mxu0 0.0
        %775 = vmatprep.subr.mxu0 0.0
        %776 = vmatpush2.msra.mxu0 0.0
        %777 = vmatprep.subr.mxu0 0.0
        %778 = vmatpush2.msra.mxu0 0.0
        %779 = vmatprep.subr.mxu0 0.0
        %780 = vmatpush2.msra.mxu0 0.0
        %781 = vmatprep.subr.mxu0 0.0
        %782 = vmatpush2.msra.mxu0 0.0
        %783 = vmatprep.subr.mxu0 0.0
        %784 = vmatpush2.msra.mxu0 0.0
        %785 = vmatprep.subr.mxu0 0.0
        %786 = vmatpush2.msra.mxu0 0.0
        %787 = vmatprep.subr.mxu0 0.0
        %788 = vmatpush2.msra.mxu0 0.0
        %789 = vmatprep.subr.mxu0 0.0
        %790 = vmatpush2.msra.mxu0 0.0
        %791 = vmatprep.subr.mxu0 0.0
        %792 = vmatpush2.msra.mxu0 0.0
        %793 = vmatprep.mubr.f32.mxu0 0.0
        %794 = vmatmul.mubr.f32.gmra.mxu0 %v615
        %v795 = vpop.f32.mrf.mxu0
        %v796 = vadd.f32 0.0, %v795
        %v797 = vpop.f32.mrf.mxu0
        %798 = vmatprep.mubr.f32.mxu0 0.0
        %799 = vmatmul.mubr.f32.gmra.mxu0 %v620
        %v800 = vpop.f32.mrf.mxu0
        %v801 = vadd.f32 0.0, %v800
        %v802 = vpop.f32.mrf.mxu0
        %803 = vmatprep.mubr.f32.mxu0 0.0
        %804 = vmatmul.mubr.f32.gmra.mxu0 %v625
        %v805 = vpop.f32.mrf.mxu0
        %v806 = vadd.f32 0.0, %v805
        %v807 = vpop.f32.mrf.mxu0
        %808 = vmatprep.mubr.f32.mxu0 0.0
        %809 = vmatmul.mubr.f32.gmra.mxu0 %v630
        %v810 = vpop.f32.mrf.mxu0
        %v811 = vadd.f32 0.0, %v810
        %v812 = vpop.f32.mrf.mxu0
        %813 = vdwg.mxu0
        %v814 = vadd.f32 %v463, %v796
        %v815 = vadd.f32 %v464, %v801
        %v816 = vadd.f32 %v465, %v806
        %v817 = vadd.f32 %v466, %v811
        %s818 = scalar_lea.vmem [#allocation2], 128
        %v819 = vld [vmem:[%s818] sm:$0xff]
        %v820 = vld [vmem:[%s818 + $0x8] sm:$0xff]
        %v821 = vld [vmem:[%s818 + $0x10] sm:$0xff]
        %v822 = vld [vmem:[%s818 + $0x18] sm:$0xff]
        %v823 = vld [vmem:[%s818 + $0x20] sm:$0xff]
        %v824 = vld [vmem:[%s818 + $0x28] sm:$0xff]
        %v825 = vld [vmem:[%s818 + $0x30] sm:$0xff]
        %v826 = vld [vmem:[%s818 + $0x38] sm:$0xff]
        %v827 = vld [vmem:[%s818 + $0x40] sm:$0xff]
        %v828 = vld [vmem:[%s818 + $0x48] sm:$0xff]
        %v829 = vld [vmem:[%s818 + $0x50] sm:$0xff]
        %v830 = vld [vmem:[%s818 + $0x58] sm:$0xff]
        %v831 = vld [vmem:[%s818 + $0x60] sm:$0xff]
        %v832 = vld [vmem:[%s818 + $0x68] sm:$0xff]
        %v833 = vld [vmem:[%s818 + $0x70] sm:$0xff]
        %v834 = vld [vmem:[%s818 + $0x78] sm:$0xff]
        %835 = vmatprep.subr.mxu0 0.0
        %836 = vmatpush1.msra.mxu0 %v834
        %837 = vmatprep.subr.mxu0 0.0
        %838 = vmatpush1.msra.mxu0 %v833
        %839 = vmatprep.subr.mxu0 0.0
        %840 = vmatpush1.msra.mxu0 %v832
        %841 = vmatprep.subr.mxu0 0.0
        %842 = vmatpush1.msra.mxu0 %v831
        %843 = vmatprep.subr.mxu0 0.0
        %844 = vmatpush1.msra.mxu0 %v830
        %845 = vmatprep.subr.mxu0 0.0
        %846 = vmatpush1.msra.mxu0 %v829
        %847 = vmatprep.subr.mxu0 0.0
        %848 = vmatpush1.msra.mxu0 %v828
        %849 = vmatprep.subr.mxu0 0.0
        %850 = vmatpush1.msra.mxu0 %v827
        %851 = vmatprep.subr.mxu0 0.0
        %852 = vmatpush1.msra.mxu0 %v826
        %853 = vmatprep.subr.mxu0 0.0
        %854 = vmatpush1.msra.mxu0 %v825
        %855 = vmatprep.subr.mxu0 0.0
        %856 = vmatpush1.msra.mxu0 %v824
        %857 = vmatprep.subr.mxu0 0.0
        %858 = vmatpush1.msra.mxu0 %v823
        %859 = vmatprep.subr.mxu0 0.0
        %860 = vmatpush1.msra.mxu0 %v822
        %861 = vmatprep.subr.mxu0 0.0
        %862 = vmatpush1.msra.mxu0 %v821
        %863 = vmatprep.subr.mxu0 0.0
        %864 = vmatpush1.msra.mxu0 %v820
        %865 = vmatprep.subr.mxu0 0.0
        %866 = vmatpush1.msra.mxu0 %v819
        %867 = vmatprep.subr.mxu0 0.0
        %868 = vmatpush2.msra.mxu0 0.0
        %869 = vmatprep.subr.mxu0 0.0
        %870 = vmatpush2.msra.mxu0 0.0
        %871 = vmatprep.subr.mxu0 0.0
        %872 = vmatpush2.msra.mxu0 0.0
        %873 = vmatprep.subr.mxu0 0.0
        %874 = vmatpush2.msra.mxu0 0.0
        %875 = vmatprep.subr.mxu0 0.0
        %876 = vmatpush2.msra.mxu0 0.0
        %877 = vmatprep.subr.mxu0 0.0
        %878 = vmatpush2.msra.mxu0 0.0
        %879 = vmatprep.subr.mxu0 0.0
        %880 = vmatpush2.msra.mxu0 0.0
        %881 = vmatprep.subr.mxu0 0.0
        %882 = vmatpush2.msra.mxu0 0.0
        %883 = vmatprep.subr.mxu0 0.0
        %884 = vmatpush2.msra.mxu0 0.0
        %885 = vmatprep.subr.mxu0 0.0
        %886 = vmatpush2.msra.mxu0 0.0
        %887 = vmatprep.subr.mxu0 0.0
        %888 = vmatpush2.msra.mxu0 0.0
        %889 = vmatprep.subr.mxu0 0.0
        %890 = vmatpush2.msra.mxu0 0.0
        %891 = vmatprep.subr.mxu0 0.0
        %892 = vmatpush2.msra.mxu0 0.0
        %893 = vmatprep.subr.mxu0 0.0
        %894 = vmatpush2.msra.mxu0 0.0
        %895 = vmatprep.subr.mxu0 0.0
        %896 = vmatpush2.msra.mxu0 0.0
        %897 = vmatprep.subr.mxu0 0.0
        %898 = vmatpush2.msra.mxu0 0.0
        %899 = vmatprep.mubr.f32.mxu0 0.0
        %900 = vmatmul.mubr.f32.gmra.mxu0 %v635
        %v901 = vpop.f32.mrf.mxu0
        %v902 = vadd.f32 0.0, %v901
        %v903 = vpop.f32.mrf.mxu0
        %904 = vmatprep.mubr.f32.mxu0 0.0
        %905 = vmatmul.mubr.f32.gmra.mxu0 %v640
        %v906 = vpop.f32.mrf.mxu0
        %v907 = vadd.f32 0.0, %v906
        %v908 = vpop.f32.mrf.mxu0
        %909 = vmatprep.mubr.f32.mxu0 0.0
        %910 = vmatmul.mubr.f32.gmra.mxu0 %v645
        %v911 = vpop.f32.mrf.mxu0
        %v912 = vadd.f32 0.0, %v911
        %v913 = vpop.f32.mrf.mxu0
        %914 = vmatprep.mubr.f32.mxu0 0.0
        %915 = vmatmul.mubr.f32.gmra.mxu0 %v650
        %v916 = vpop.f32.mrf.mxu0
        %v917 = vadd.f32 0.0, %v916
        %v918 = vpop.f32.mrf.mxu0
        %919 = vdwg.mxu0
        %v920 = vadd.f32 %v814, %v902
        %v921 = vadd.f32 %v815, %v907
        %v922 = vadd.f32 %v816, %v912
        %v923 = vadd.f32 %v817, %v917
        %s924 = scalar_lea.vmem [#allocation2], 256
        %v925 = vld [vmem:[%s924] sm:$0xff]
        %v926 = vld [vmem:[%s924 + $0x8] sm:$0xff]
        %v927 = vld [vmem:[%s924 + $0x10] sm:$0xff]
        %v928 = vld [vmem:[%s924 + $0x18] sm:$0xff]
        %v929 = vld [vmem:[%s924 + $0x20] sm:$0xff]
        %v930 = vld [vmem:[%s924 + $0x28] sm:$0xff]
        %v931 = vld [vmem:[%s924 + $0x30] sm:$0xff]
        %v932 = vld [vmem:[%s924 + $0x38] sm:$0xff]
        %v933 = vld [vmem:[%s924 + $0x40] sm:$0xff]
        %v934 = vld [vmem:[%s924 + $0x48] sm:$0xff]
        %v935 = vld [vmem:[%s924 + $0x50] sm:$0xff]
        %v936 = vld [vmem:[%s924 + $0x58] sm:$0xff]
        %v937 = vld [vmem:[%s924 + $0x60] sm:$0xff]
        %v938 = vld [vmem:[%s924 + $0x68] sm:$0xff]
        %v939 = vld [vmem:[%s924 + $0x70] sm:$0xff]
        %v940 = vld [vmem:[%s924 + $0x78] sm:$0xff]
        %941 = vmatprep.subr.mxu0 0.0
        %942 = vmatpush1.msra.mxu0 %v940
        %943 = vmatprep.subr.mxu0 0.0
        %944 = vmatpush1.msra.mxu0 %v939
        %945 = vmatprep.subr.mxu0 0.0
        %946 = vmatpush1.msra.mxu0 %v938
        %947 = vmatprep.subr.mxu0 0.0
        %948 = vmatpush1.msra.mxu0 %v937
        %949 = vmatprep.subr.mxu0 0.0
        %950 = vmatpush1.msra.mxu0 %v936
        %951 = vmatprep.subr.mxu0 0.0
        %952 = vmatpush1.msra.mxu0 %v935
        %953 = vmatprep.subr.mxu0 0.0
        %954 = vmatpush1.msra.mxu0 %v934
        %955 = vmatprep.subr.mxu0 0.0
        %956 = vmatpush1.msra.mxu0 %v933
        %957 = vmatprep.subr.mxu0 0.0
        %958 = vmatpush1.msra.mxu0 %v932
        %959 = vmatprep.subr.mxu0 0.0
        %960 = vmatpush1.msra.mxu0 %v931
        %961 = vmatprep.subr.mxu0 0.0
        %962 = vmatpush1.msra.mxu0 %v930
        %963 = vmatprep.subr.mxu0 0.0
        %964 = vmatpush1.msra.mxu0 %v929
        %965 = vmatprep.subr.mxu0 0.0
        %966 = vmatpush1.msra.mxu0 %v928
        %967 = vmatprep.subr.mxu0 0.0
        %968 = vmatpush1.msra.mxu0 %v927
        %969 = vmatprep.subr.mxu0 0.0
        %970 = vmatpush1.msra.mxu0 %v926
        %971 = vmatprep.subr.mxu0 0.0
        %972 = vmatpush1.msra.mxu0 %v925
        %973 = vmatprep.subr.mxu0 0.0
        %974 = vmatpush2.msra.mxu0 0.0
        %975 = vmatprep.subr.mxu0 0.0
        %976 = vmatpush2.msra.mxu0 0.0
        %977 = vmatprep.subr.mxu0 0.0
        %978 = vmatpush2.msra.mxu0 0.0
        %979 = vmatprep.subr.mxu0 0.0
        %980 = vmatpush2.msra.mxu0 0.0
        %981 = vmatprep.subr.mxu0 0.0
        %982 = vmatpush2.msra.mxu0 0.0
        %983 = vmatprep.subr.mxu0 0.0
        %984 = vmatpush2.msra.mxu0 0.0
        %985 = vmatprep.subr.mxu0 0.0
        %986 = vmatpush2.msra.mxu0 0.0
        %987 = vmatprep.subr.mxu0 0.0
        %988 = vmatpush2.msra.mxu0 0.0
        %989 = vmatprep.subr.mxu0 0.0
        %990 = vmatpush2.msra.mxu0 0.0
        %991 = vmatprep.subr.mxu0 0.0
        %992 = vmatpush2.msra.mxu0 0.0
        %993 = vmatprep.subr.mxu0 0.0
        %994 = vmatpush2.msra.mxu0 0.0
        %995 = vmatprep.subr.mxu0 0.0
        %996 = vmatpush2.msra.mxu0 0.0
        %997 = vmatprep.subr.mxu0 0.0
        %998 = vmatpush2.msra.mxu0 0.0
        %999 = vmatprep.subr.mxu0 0.0
        %1000 = vmatpush2.msra.mxu0 0.0
        %1001 = vmatprep.subr.mxu0 0.0
        %1002 = vmatpush2.msra.mxu0 0.0
        %1003 = vmatprep.subr.mxu0 0.0
        %1004 = vmatpush2.msra.mxu0 0.0
        %1005 = vmatprep.mubr.f32.mxu0 0.0
        %1006 = vmatmul.mubr.f32.gmra.mxu0 %v655
        %v1007 = vpop.f32.mrf.mxu0
        %v1008 = vadd.f32 0.0, %v1007
        %v1009 = vpop.f32.mrf.mxu0
        %1010 = vmatprep.mubr.f32.mxu0 0.0
        %1011 = vmatmul.mubr.f32.gmra.mxu0 %v660
        %v1012 = vpop.f32.mrf.mxu0
        %v1013 = vadd.f32 0.0, %v1012
        %v1014 = vpop.f32.mrf.mxu0
        %1015 = vmatprep.mubr.f32.mxu0 0.0
        %1016 = vmatmul.mubr.f32.gmra.mxu0 %v665
        %v1017 = vpop.f32.mrf.mxu0
        %v1018 = vadd.f32 0.0, %v1017
        %v1019 = vpop.f32.mrf.mxu0
        %1020 = vmatprep.mubr.f32.mxu0 0.0
        %1021 = vmatmul.mubr.f32.gmra.mxu0 %v670
        %v1022 = vpop.f32.mrf.mxu0
        %v1023 = vadd.f32 0.0, %v1022
        %v1024 = vpop.f32.mrf.mxu0
        %1025 = vdwg.mxu0
        %v1026 = vadd.f32 %v920, %v1008
        %v1027 = vadd.f32 %v921, %v1013
        %v1028 = vadd.f32 %v922, %v1018
        %v1029 = vadd.f32 %v923, %v1023
        %s1030 = scalar_lea.vmem [#allocation2], 384
        %v1031 = vld [vmem:[%s1030] sm:$0xff]
        %v1032 = vld [vmem:[%s1030 + $0x8] sm:$0xff]
        %v1033 = vld [vmem:[%s1030 + $0x10] sm:$0xff]
        %v1034 = vld [vmem:[%s1030 + $0x18] sm:$0xff]
        %v1035 = vld [vmem:[%s1030 + $0x20] sm:$0xff]
        %v1036 = vld [vmem:[%s1030 + $0x28] sm:$0xff]
        %v1037 = vld [vmem:[%s1030 + $0x30] sm:$0xff]
        %v1038 = vld [vmem:[%s1030 + $0x38] sm:$0xff]
        %v1039 = vld [vmem:[%s1030 + $0x40] sm:$0xff]
        %v1040 = vld [vmem:[%s1030 + $0x48] sm:$0xff]
        %v1041 = vld [vmem:[%s1030 + $0x50] sm:$0xff]
        %v1042 = vld [vmem:[%s1030 + $0x58] sm:$0xff]
        %v1043 = vld [vmem:[%s1030 + $0x60] sm:$0xff]
        %v1044 = vld [vmem:[%s1030 + $0x68] sm:$0xff]
        %v1045 = vld [vmem:[%s1030 + $0x70] sm:$0xff]
        %v1046 = vld [vmem:[%s1030 + $0x78] sm:$0xff]
        %1047 = vmatprep.subr.mxu0 0.0
        %1048 = vmatpush1.msra.mxu0 %v1046
        %1049 = vmatprep.subr.mxu0 0.0
        %1050 = vmatpush1.msra.mxu0 %v1045
        %1051 = vmatprep.subr.mxu0 0.0
        %1052 = vmatpush1.msra.mxu0 %v1044
        %1053 = vmatprep.subr.mxu0 0.0
        %1054 = vmatpush1.msra.mxu0 %v1043
        %1055 = vmatprep.subr.mxu0 0.0
        %1056 = vmatpush1.msra.mxu0 %v1042
        %1057 = vmatprep.subr.mxu0 0.0
        %1058 = vmatpush1.msra.mxu0 %v1041
        %1059 = vmatprep.subr.mxu0 0.0
        %1060 = vmatpush1.msra.mxu0 %v1040
        %1061 = vmatprep.subr.mxu0 0.0
        %1062 = vmatpush1.msra.mxu0 %v1039
        %1063 = vmatprep.subr.mxu0 0.0
        %1064 = vmatpush1.msra.mxu0 %v1038
        %1065 = vmatprep.subr.mxu0 0.0
        %1066 = vmatpush1.msra.mxu0 %v1037
        %1067 = vmatprep.subr.mxu0 0.0
        %1068 = vmatpush1.msra.mxu0 %v1036
        %1069 = vmatprep.subr.mxu0 0.0
        %1070 = vmatpush1.msra.mxu0 %v1035
        %1071 = vmatprep.subr.mxu0 0.0
        %1072 = vmatpush1.msra.mxu0 %v1034
        %1073 = vmatprep.subr.mxu0 0.0
        %1074 = vmatpush1.msra.mxu0 %v1033
        %1075 = vmatprep.subr.mxu0 0.0
        %1076 = vmatpush1.msra.mxu0 %v1032
        %1077 = vmatprep.subr.mxu0 0.0
        %1078 = vmatpush1.msra.mxu0 %v1031
        %1079 = vmatprep.subr.mxu0 0.0
        %1080 = vmatpush2.msra.mxu0 0.0
        %1081 = vmatprep.subr.mxu0 0.0
        %1082 = vmatpush2.msra.mxu0 0.0
        %1083 = vmatprep.subr.mxu0 0.0
        %1084 = vmatpush2.msra.mxu0 0.0
        %1085 = vmatprep.subr.mxu0 0.0
        %1086 = vmatpush2.msra.mxu0 0.0
        %1087 = vmatprep.subr.mxu0 0.0
        %1088 = vmatpush2.msra.mxu0 0.0
        %1089 = vmatprep.subr.mxu0 0.0
        %1090 = vmatpush2.msra.mxu0 0.0
        %1091 = vmatprep.subr.mxu0 0.0
        %1092 = vmatpush2.msra.mxu0 0.0
        %1093 = vmatprep.subr.mxu0 0.0
        %1094 = vmatpush2.msra.mxu0 0.0
        %1095 = vmatprep.subr.mxu0 0.0
        %1096 = vmatpush2.msra.mxu0 0.0
        %1097 = vmatprep.subr.mxu0 0.0
        %1098 = vmatpush2.msra.mxu0 0.0
        %1099 = vmatprep.subr.mxu0 0.0
        %1100 = vmatpush2.msra.mxu0 0.0
        %1101 = vmatprep.subr.mxu0 0.0
        %1102 = vmatpush2.msra.mxu0 0.0
        %1103 = vmatprep.subr.mxu0 0.0
        %1104 = vmatpush2.msra.mxu0 0.0
        %1105 = vmatprep.subr.mxu0 0.0
        %1106 = vmatpush2.msra.mxu0 0.0
        %1107 = vmatprep.subr.mxu0 0.0
        %1108 = vmatpush2.msra.mxu0 0.0
        %1109 = vmatprep.subr.mxu0 0.0
        %1110 = vmatpush2.msra.mxu0 0.0
        %1111 = vmatprep.mubr.f32.mxu0 0.0
        %1112 = vmatmul.mubr.f32.gmra.mxu0 %v675
        %v1113 = vpop.f32.mrf.mxu0
        %v1114 = vadd.f32 0.0, %v1113
        %v1115 = vpop.f32.mrf.mxu0
        %1116 = vmatprep.mubr.f32.mxu0 0.0
        %1117 = vmatmul.mubr.f32.gmra.mxu0 %v680
        %v1118 = vpop.f32.mrf.mxu0
        %v1119 = vadd.f32 0.0, %v1118
        %v1120 = vpop.f32.mrf.mxu0
        %1121 = vmatprep.mubr.f32.mxu0 0.0
        %1122 = vmatmul.mubr.f32.gmra.mxu0 %v685
        %v1123 = vpop.f32.mrf.mxu0
        %v1124 = vadd.f32 0.0, %v1123
        %v1125 = vpop.f32.mrf.mxu0
        %1126 = vmatprep.mubr.f32.mxu0 0.0
        %1127 = vmatmul.mubr.f32.gmra.mxu0 %v690
        %v1128 = vpop.f32.mrf.mxu0
        %v1129 = vadd.f32 0.0, %v1128
        %v1130 = vpop.f32.mrf.mxu0
        %1131 = vdwg.mxu0
        %v1132 = vadd.f32 %v1026, %v1114
        %v1133 = vadd.f32 %v1027, %v1119
        %v1134 = vadd.f32 %v1028, %v1124
        %v1135 = vadd.f32 %v1029, %v1129
        %s1136 = scalar_lea.vmem [#allocation2], 512
        %v1137 = vld [vmem:[%s1136] sm:$0xff]
        %v1138 = vld [vmem:[%s1136 + $0x8] sm:$0xff]
        %v1139 = vld [vmem:[%s1136 + $0x10] sm:$0xff]
        %v1140 = vld [vmem:[%s1136 + $0x18] sm:$0xff]
        %v1141 = vld [vmem:[%s1136 + $0x20] sm:$0xff]
        %v1142 = vld [vmem:[%s1136 + $0x28] sm:$0xff]
        %v1143 = vld [vmem:[%s1136 + $0x30] sm:$0xff]
        %v1144 = vld [vmem:[%s1136 + $0x38] sm:$0xff]
        %v1145 = vld [vmem:[%s1136 + $0x40] sm:$0xff]
        %v1146 = vld [vmem:[%s1136 + $0x48] sm:$0xff]
        %v1147 = vld [vmem:[%s1136 + $0x50] sm:$0xff]
        %v1148 = vld [vmem:[%s1136 + $0x58] sm:$0xff]
        %v1149 = vld [vmem:[%s1136 + $0x60] sm:$0xff]
        %v1150 = vld [vmem:[%s1136 + $0x68] sm:$0xff]
        %v1151 = vld [vmem:[%s1136 + $0x70] sm:$0xff]
        %v1152 = vld [vmem:[%s1136 + $0x78] sm:$0xff]
        %1153 = vmatprep.subr.mxu0 0.0
        %1154 = vmatpush1.msra.mxu0 %v1152
        %1155 = vmatprep.subr.mxu0 0.0
        %1156 = vmatpush1.msra.mxu0 %v1151
        %1157 = vmatprep.subr.mxu0 0.0
        %1158 = vmatpush1.msra.mxu0 %v1150
        %1159 = vmatprep.subr.mxu0 0.0
        %1160 = vmatpush1.msra.mxu0 %v1149
        %1161 = vmatprep.subr.mxu0 0.0
        %1162 = vmatpush1.msra.mxu0 %v1148
        %1163 = vmatprep.subr.mxu0 0.0
        %1164 = vmatpush1.msra.mxu0 %v1147
        %1165 = vmatprep.subr.mxu0 0.0
        %1166 = vmatpush1.msra.mxu0 %v1146
        %1167 = vmatprep.subr.mxu0 0.0
        %1168 = vmatpush1.msra.mxu0 %v1145
        %1169 = vmatprep.subr.mxu0 0.0
        %1170 = vmatpush1.msra.mxu0 %v1144
        %1171 = vmatprep.subr.mxu0 0.0
        %1172 = vmatpush1.msra.mxu0 %v1143
        %1173 = vmatprep.subr.mxu0 0.0
        %1174 = vmatpush1.msra.mxu0 %v1142
        %1175 = vmatprep.subr.mxu0 0.0
        %1176 = vmatpush1.msra.mxu0 %v1141
        %1177 = vmatprep.subr.mxu0 0.0
        %1178 = vmatpush1.msra.mxu0 %v1140
        %1179 = vmatprep.subr.mxu0 0.0
        %1180 = vmatpush1.msra.mxu0 %v1139
        %1181 = vmatprep.subr.mxu0 0.0
        %1182 = vmatpush1.msra.mxu0 %v1138
        %1183 = vmatprep.subr.mxu0 0.0
        %1184 = vmatpush1.msra.mxu0 %v1137
        %1185 = vmatprep.subr.mxu0 0.0
        %1186 = vmatpush2.msra.mxu0 0.0
        %1187 = vmatprep.subr.mxu0 0.0
        %1188 = vmatpush2.msra.mxu0 0.0
        %1189 = vmatprep.subr.mxu0 0.0
        %1190 = vmatpush2.msra.mxu0 0.0
        %1191 = vmatprep.subr.mxu0 0.0
        %1192 = vmatpush2.msra.mxu0 0.0
        %1193 = vmatprep.subr.mxu0 0.0
        %1194 = vmatpush2.msra.mxu0 0.0
        %1195 = vmatprep.subr.mxu0 0.0
        %1196 = vmatpush2.msra.mxu0 0.0
        %1197 = vmatprep.subr.mxu0 0.0
        %1198 = vmatpush2.msra.mxu0 0.0
        %1199 = vmatprep.subr.mxu0 0.0
        %1200 = vmatpush2.msra.mxu0 0.0
        %1201 = vmatprep.subr.mxu0 0.0
        %1202 = vmatpush2.msra.mxu0 0.0
        %1203 = vmatprep.subr.mxu0 0.0
        %1204 = vmatpush2.msra.mxu0 0.0
        %1205 = vmatprep.subr.mxu0 0.0
        %1206 = vmatpush2.msra.mxu0 0.0
        %1207 = vmatprep.subr.mxu0 0.0
        %1208 = vmatpush2.msra.mxu0 0.0
        %1209 = vmatprep.subr.mxu0 0.0
        %1210 = vmatpush2.msra.mxu0 0.0
        %1211 = vmatprep.subr.mxu0 0.0
        %1212 = vmatpush2.msra.mxu0 0.0
        %1213 = vmatprep.subr.mxu0 0.0
        %1214 = vmatpush2.msra.mxu0 0.0
        %1215 = vmatprep.subr.mxu0 0.0
        %1216 = vmatpush2.msra.mxu0 0.0
        %1217 = vmatprep.mubr.f32.mxu0 0.0
        %1218 = vmatmul.mubr.f32.gmra.mxu0 %v695
        %v1219 = vpop.f32.mrf.mxu0
        %v1220 = vadd.f32 0.0, %v1219
        %v1221 = vpop.f32.mrf.mxu0
        %1222 = vmatprep.mubr.f32.mxu0 0.0
        %1223 = vmatmul.mubr.f32.gmra.mxu0 %v700
        %v1224 = vpop.f32.mrf.mxu0
        %v1225 = vadd.f32 0.0, %v1224
        %v1226 = vpop.f32.mrf.mxu0
        %1227 = vmatprep.mubr.f32.mxu0 0.0
        %1228 = vmatmul.mubr.f32.gmra.mxu0 %v705
        %v1229 = vpop.f32.mrf.mxu0
        %v1230 = vadd.f32 0.0, %v1229
        %v1231 = vpop.f32.mrf.mxu0
        %1232 = vmatprep.mubr.f32.mxu0 0.0
        %1233 = vmatmul.mubr.f32.gmra.mxu0 %v710
        %v1234 = vpop.f32.mrf.mxu0
        %v1235 = vadd.f32 0.0, %v1234
        %v1236 = vpop.f32.mrf.mxu0
        %1237 = vdwg.mxu0
        %v1238 = vadd.f32 %v1132, %v1220
        %v1239 = vadd.f32 %v1133, %v1225
        %v1240 = vadd.f32 %v1134, %v1230
        %v1241 = vadd.f32 %v1135, %v1235
        %v1242 = vxor.u32 %v1240, 2147483648
        %v1243 = vxor.u32 %v1241, 2147483648
        %v1244 = vmul.f32 %v1242, 1.442695
        %v1245 = vpow.pop %v1244
        %v1246 = vmul.f32 %v1243, 1.442695
        %v1247 = vpow.pop %v1246
        %v1248 = vadd.f32 %v1245, 1.0
        %v1249 = vadd.f32 %v1247, 1.0
        %v1250 = vrcp.pop %v1248
        %v1251 = vmul.f32 1.0, %v1250
        %v1252 = vrcp.pop %v1249
        %v1253 = vmul.f32 1.0, %v1252
        %v1254 = vmul.f32 %v1238, %v1251
        %v1255 = vmul.f32 %v1239, %v1253
        %v1256 = vld [vmem:[%s454] sm:$0xff]
        %v1257 = vld [vmem:[%s454 + $0x8] sm:$0xff]
        %v1258 = vld [vmem:[%s5] sm:$0xff]
        %v1259 = vld [vmem:[%s5 + $0x8] sm:$0xff]
        %v1260 = vld [vmem:[%s5 + $0x10] sm:$0xff]
        %v1261 = vld [vmem:[%s5 + $0x18] sm:$0xff]
        %v1262 = vld [vmem:[%s5 + $0x20] sm:$0xff]
        %v1263 = vld [vmem:[%s5 + $0x28] sm:$0xff]
        %v1264 = vld [vmem:[%s5 + $0x30] sm:$0xff]
        %v1265 = vld [vmem:[%s5 + $0x38] sm:$0xff]
        %vm1266 = vcmask 130048
        %v1268 = vsel %vm1266, %v1258, 0
        %v1271 = vsel %vm1266, %v1259, 0
        %v1274 = vsel %vm1266, %v1260, 0
        %v1277 = vsel %vm1266, %v1261, 0
        %v1280 = vsel %vm1266, %v1262, 0
        %v1283 = vsel %vm1266, %v1263, 0
        %v1286 = vsel %vm1266, %v1264, 0
        %v1289 = vsel %vm1266, %v1265, 0
        %1291 = vmatprep.subr.mxu0 0.0
        %1292 = vmatpush1.msra.mxu0 0.0
        %1293 = vmatprep.subr.mxu0 0.0
        %1294 = vmatpush1.msra.mxu0 0.0
        %1295 = vmatprep.subr.mxu0 0.0
        %1296 = vmatpush1.msra.mxu0 0.0
        %1297 = vmatprep.subr.mxu0 0.0
        %1298 = vmatpush1.msra.mxu0 0.0
        %1299 = vmatprep.subr.mxu0 0.0
        %1300 = vmatpush1.msra.mxu0 0.0
        %1301 = vmatprep.subr.mxu0 0.0
        %1302 = vmatpush1.msra.mxu0 0.0
        %1303 = vmatprep.subr.mxu0 0.0
        %1304 = vmatpush1.msra.mxu0 0.0
        %1305 = vmatprep.subr.mxu0 0.0
        %1306 = vmatpush1.msra.mxu0 0.0
        %1307 = vmatprep.subr.mxu0 0.0
        %1308 = vmatpush1.msra.mxu0 0.0
        %1309 = vmatprep.subr.mxu0 0.0
        %1310 = vmatpush1.msra.mxu0 0.0
        %1311 = vmatprep.subr.mxu0 0.0
        %1312 = vmatpush1.msra.mxu0 0.0
        %1313 = vmatprep.subr.mxu0 0.0
        %1314 = vmatpush1.msra.mxu0 0.0
        %1315 = vmatprep.subr.mxu0 0.0
        %1316 = vmatpush1.msra.mxu0 0.0
        %1317 = vmatprep.subr.mxu0 0.0
        %1318 = vmatpush1.msra.mxu0 0.0
        %1319 = vmatprep.subr.mxu0 0.0
        %1320 = vmatpush1.msra.mxu0 %v1255
        %1321 = vmatprep.subr.mxu0 0.0
        %1322 = vmatpush1.msra.mxu0 %v1254
        %1323 = vmatprep.subr.mxu0 0.0
        %1324 = vmatpush2.msra.mxu0 0.0
        %1325 = vmatprep.subr.mxu0 0.0
        %1326 = vmatpush2.msra.mxu0 0.0
        %1327 = vmatprep.subr.mxu0 0.0
        %1328 = vmatpush2.msra.mxu0 0.0
        %1329 = vmatprep.subr.mxu0 0.0
        %1330 = vmatpush2.msra.mxu0 0.0
        %1331 = vmatprep.subr.mxu0 0.0
        %1332 = vmatpush2.msra.mxu0 0.0
        %1333 = vmatprep.subr.mxu0 0.0
        %1334 = vmatpush2.msra.mxu0 0.0
        %1335 = vmatprep.subr.mxu0 0.0
        %1336 = vmatpush2.msra.mxu0 0.0
        %1337 = vmatprep.subr.mxu0 0.0
        %1338 = vmatpush2.msra.mxu0 0.0
        %1339 = vmatprep.subr.mxu0 0.0
        %1340 = vmatpush2.msra.mxu0 0.0
        %1341 = vmatprep.subr.mxu0 0.0
        %1342 = vmatpush2.msra.mxu0 0.0
        %1343 = vmatprep.subr.mxu0 0.0
        %1344 = vmatpush2.msra.mxu0 0.0
        %1345 = vmatprep.subr.mxu0 0.0
        %1346 = vmatpush2.msra.mxu0 0.0
        %1347 = vmatprep.subr.mxu0 0.0
        %1348 = vmatpush2.msra.mxu0 0.0
        %1349 = vmatprep.subr.mxu0 0.0
        %1350 = vmatpush2.msra.mxu0 0.0
        %1351 = vmatprep.subr.mxu0 0.0
        %1352 = vmatpush2.msra.mxu0 0.0
        %1353 = vmatprep.subr.mxu0 0.0
        %1354 = vmatpush2.msra.mxu0 0.0
        %1355 = vmatprep.mubr.f32.mxu0 0.0
        %1356 = vmatmul.mubr.f32.gmra.mxu0 %v1268
        %v1357 = vpop.f32.mrf.mxu0
        %v1358 = vadd.f32 0.0, %v1357
        %v1359 = vpop.f32.mrf.mxu0
        %1360 = vmatprep.mubr.f32.mxu0 0.0
        %1361 = vmatmul.mubr.f32.gmra.mxu0 %v1271
        %v1362 = vpop.f32.mrf.mxu0
        %v1363 = vadd.f32 0.0, %v1362
        %v1364 = vpop.f32.mrf.mxu0
        %1365 = vmatprep.mubr.f32.mxu0 0.0
        %1366 = vmatmul.mubr.f32.gmra.mxu0 %v1274
        %v1367 = vpop.f32.mrf.mxu0
        %v1368 = vadd.f32 0.0, %v1367
        %v1369 = vpop.f32.mrf.mxu0
        %1370 = vmatprep.mubr.f32.mxu0 0.0
        %1371 = vmatmul.mubr.f32.gmra.mxu0 %v1277
        %v1372 = vpop.f32.mrf.mxu0
        %v1373 = vadd.f32 0.0, %v1372
        %v1374 = vpop.f32.mrf.mxu0
        %1375 = vmatprep.mubr.f32.mxu0 0.0
        %1376 = vmatmul.mubr.f32.gmra.mxu0 %v1280
        %v1377 = vpop.f32.mrf.mxu0
        %v1378 = vadd.f32 0.0, %v1377
        %v1379 = vpop.f32.mrf.mxu0
        %1380 = vmatprep.mubr.f32.mxu0 0.0
        %1381 = vmatmul.mubr.f32.gmra.mxu0 %v1283
        %v1382 = vpop.f32.mrf.mxu0
        %v1383 = vadd.f32 0.0, %v1382
        %v1384 = vpop.f32.mrf.mxu0
        %1385 = vmatprep.mubr.f32.mxu0 0.0
        %1386 = vmatmul.mubr.f32.gmra.mxu0 %v1286
        %v1387 = vpop.f32.mrf.mxu0
        %v1388 = vadd.f32 0.0, %v1387
        %v1389 = vpop.f32.mrf.mxu0
        %1390 = vmatprep.mubr.f32.mxu0 0.0
        %1391 = vmatmul.mubr.f32.gmra.mxu0 %v1289
        %v1392 = vpop.f32.mrf.mxu0
        %v1393 = vadd.f32 0.0, %v1392
        %v1394 = vpop.f32.mrf.mxu0
        %1395 = vdwg.mxu0
        %v1396 = vld [vmem:[#allocation5] sm:$0xff]
        %v1397 = vld [vmem:[#allocation5 + $0x8] sm:$0xff]
        %v1398 = vld [vmem:[#allocation5 + $0x10] sm:$0xff]
        %v1399 = vld [vmem:[#allocation5 + $0x18] sm:$0xff]
        %v1400 = vld [vmem:[#allocation5 + $0x20] sm:$0xff]
        %v1401 = vld [vmem:[#allocation5 + $0x28] sm:$0xff]
        %v1402 = vld [vmem:[#allocation5 + $0x30] sm:$0xff]
        %v1403 = vld [vmem:[#allocation5 + $0x38] sm:$0xff]
        %v1404 = vld [vmem:[#allocation5 + $0x40] sm:$0xff]
        %v1405 = vld [vmem:[#allocation5 + $0x48] sm:$0xff]
        %v1406 = vld [vmem:[#allocation5 + $0x50] sm:$0xff]
        %v1407 = vld [vmem:[#allocation5 + $0x58] sm:$0xff]
        %v1408 = vld [vmem:[#allocation5 + $0x60] sm:$0xff]
        %v1409 = vld [vmem:[#allocation5 + $0x68] sm:$0xff]
        %v1410 = vld [vmem:[#allocation5 + $0x70] sm:$0xff]
        %v1411 = vld [vmem:[#allocation5 + $0x78] sm:$0xff]
        %1412 = vmatprep.subr.mxu0 0.0
        %1413 = vmatpush1.msra.mxu0 %v1411
        %1414 = vmatprep.subr.mxu0 0.0
        %1415 = vmatpush1.msra.mxu0 %v1410
        %1416 = vmatprep.subr.mxu0 0.0
        %1417 = vmatpush1.msra.mxu0 %v1409
        %1418 = vmatprep.subr.mxu0 0.0
        %1419 = vmatpush1.msra.mxu0 %v1408
        %1420 = vmatprep.subr.mxu0 0.0
        %1421 = vmatpush1.msra.mxu0 %v1407
        %1422 = vmatprep.subr.mxu0 0.0
        %1423 = vmatpush1.msra.mxu0 %v1406
        %1424 = vmatprep.subr.mxu0 0.0
        %1425 = vmatpush1.msra.mxu0 %v1405
        %1426 = vmatprep.subr.mxu0 0.0
        %1427 = vmatpush1.msra.mxu0 %v1404
        %1428 = vmatprep.subr.mxu0 0.0
        %1429 = vmatpush1.msra.mxu0 %v1403
        %1430 = vmatprep.subr.mxu0 0.0
        %1431 = vmatpush1.msra.mxu0 %v1402
        %1432 = vmatprep.subr.mxu0 0.0
        %1433 = vmatpush1.msra.mxu0 %v1401
        %1434 = vmatprep.subr.mxu0 0.0
        %1435 = vmatpush1.msra.mxu0 %v1400
        %1436 = vmatprep.subr.mxu0 0.0
        %1437 = vmatpush1.msra.mxu0 %v1399
        %1438 = vmatprep.subr.mxu0 0.0
        %1439 = vmatpush1.msra.mxu0 %v1398
        %1440 = vmatprep.subr.mxu0 0.0
        %1441 = vmatpush1.msra.mxu0 %v1397
        %1442 = vmatprep.subr.mxu0 0.0
        %1443 = vmatpush1.msra.mxu0 %v1396
        %1444 = vmatprep.subr.mxu0 0.0
        %1445 = vmatpush2.msra.mxu0 0.0
        %1446 = vmatprep.subr.mxu0 0.0
        %1447 = vmatpush2.msra.mxu0 0.0
        %1448 = vmatprep.subr.mxu0 0.0
        %1449 = vmatpush2.msra.mxu0 0.0
        %1450 = vmatprep.subr.mxu0 0.0
        %1451 = vmatpush2.msra.mxu0 0.0
        %1452 = vmatprep.subr.mxu0 0.0
        %1453 = vmatpush2.msra.mxu0 0.0
        %1454 = vmatprep.subr.mxu0 0.0
        %1455 = vmatpush2.msra.mxu0 0.0
        %1456 = vmatprep.subr.mxu0 0.0
        %1457 = vmatpush2.msra.mxu0 0.0
        %1458 = vmatprep.subr.mxu0 0.0
        %1459 = vmatpush2.msra.mxu0 0.0
        %1460 = vmatprep.subr.mxu0 0.0
        %1461 = vmatpush2.msra.mxu0 0.0
        %1462 = vmatprep.subr.mxu0 0.0
        %1463 = vmatpush2.msra.mxu0 0.0
        %1464 = vmatprep.subr.mxu0 0.0
        %1465 = vmatpush2.msra.mxu0 0.0
        %1466 = vmatprep.subr.mxu0 0.0
        %1467 = vmatpush2.msra.mxu0 0.0
        %1468 = vmatprep.subr.mxu0 0.0
        %1469 = vmatpush2.msra.mxu0 0.0
        %1470 = vmatprep.subr.mxu0 0.0
        %1471 = vmatpush2.msra.mxu0 0.0
        %1472 = vmatprep.subr.mxu0 0.0
        %1473 = vmatpush2.msra.mxu0 0.0
        %1474 = vmatprep.subr.mxu0 0.0
        %1475 = vmatpush2.msra.mxu0 0.0
        %1476 = vmatprep.mubr.f32.mxu0 0.0
        %1477 = vmatmul.mubr.f32.gmra.mxu0 %v1358
        %v1478 = vpop.f32.mrf.mxu0
        %v1479 = vadd.f32 0.0, %v1478
        %v1480 = vpop.f32.mrf.mxu0
        %1481 = vmatprep.mubr.f32.mxu0 0.0
        %1482 = vmatmul.mubr.f32.gmra.mxu0 %v1363
        %v1483 = vpop.f32.mrf.mxu0
        %v1484 = vadd.f32 0.0, %v1483
        %v1485 = vpop.f32.mrf.mxu0
        %1486 = vdwg.mxu0
        %v1487 = vadd.f32 %v1256, %v1479
        %v1488 = vadd.f32 %v1257, %v1484
        %s1489 = scalar_lea.vmem [#allocation5], 128
        %v1490 = vld [vmem:[%s1489] sm:$0xff]
        %v1491 = vld [vmem:[%s1489 + $0x8] sm:$0xff]
        %v1492 = vld [vmem:[%s1489 + $0x10] sm:$0xff]
        %v1493 = vld [vmem:[%s1489 + $0x18] sm:$0xff]
        %v1494 = vld [vmem:[%s1489 + $0x20] sm:$0xff]
        %v1495 = vld [vmem:[%s1489 + $0x28] sm:$0xff]
        %v1496 = vld [vmem:[%s1489 + $0x30] sm:$0xff]
        %v1497 = vld [vmem:[%s1489 + $0x38] sm:$0xff]
        %v1498 = vld [vmem:[%s1489 + $0x40] sm:$0xff]
        %v1499 = vld [vmem:[%s1489 + $0x48] sm:$0xff]
        %v1500 = vld [vmem:[%s1489 + $0x50] sm:$0xff]
        %v1501 = vld [vmem:[%s1489 + $0x58] sm:$0xff]
        %v1502 = vld [vmem:[%s1489 + $0x60] sm:$0xff]
        %v1503 = vld [vmem:[%s1489 + $0x68] sm:$0xff]
        %v1504 = vld [vmem:[%s1489 + $0x70] sm:$0xff]
        %v1505 = vld [vmem:[%s1489 + $0x78] sm:$0xff]
        %1506 = vmatprep.subr.mxu0 0.0
        %1507 = vmatpush1.msra.mxu0 %v1505
        %1508 = vmatprep.subr.mxu0 0.0
        %1509 = vmatpush1.msra.mxu0 %v1504
        %1510 = vmatprep.subr.mxu0 0.0
        %1511 = vmatpush1.msra.mxu0 %v1503
        %1512 = vmatprep.subr.mxu0 0.0
        %1513 = vmatpush1.msra.mxu0 %v1502
        %1514 = vmatprep.subr.mxu0 0.0
        %1515 = vmatpush1.msra.mxu0 %v1501
        %1516 = vmatprep.subr.mxu0 0.0
        %1517 = vmatpush1.msra.mxu0 %v1500
        %1518 = vmatprep.subr.mxu0 0.0
        %1519 = vmatpush1.msra.mxu0 %v1499
        %1520 = vmatprep.subr.mxu0 0.0
        %1521 = vmatpush1.msra.mxu0 %v1498
        %1522 = vmatprep.subr.mxu0 0.0
        %1523 = vmatpush1.msra.mxu0 %v1497
        %1524 = vmatprep.subr.mxu0 0.0
        %1525 = vmatpush1.msra.mxu0 %v1496
        %1526 = vmatprep.subr.mxu0 0.0
        %1527 = vmatpush1.msra.mxu0 %v1495
        %1528 = vmatprep.subr.mxu0 0.0
        %1529 = vmatpush1.msra.mxu0 %v1494
        %1530 = vmatprep.subr.mxu0 0.0
        %1531 = vmatpush1.msra.mxu0 %v1493
        %1532 = vmatprep.subr.mxu0 0.0
        %1533 = vmatpush1.msra.mxu0 %v1492
        %1534 = vmatprep.subr.mxu0 0.0
        %1535 = vmatpush1.msra.mxu0 %v1491
        %1536 = vmatprep.subr.mxu0 0.0
        %1537 = vmatpush1.msra.mxu0 %v1490
        %1538 = vmatprep.subr.mxu0 0.0
        %1539 = vmatpush2.msra.mxu0 0.0
        %1540 = vmatprep.subr.mxu0 0.0
        %1541 = vmatpush2.msra.mxu0 0.0
        %1542 = vmatprep.subr.mxu0 0.0
        %1543 = vmatpush2.msra.mxu0 0.0
        %1544 = vmatprep.subr.mxu0 0.0
        %1545 = vmatpush2.msra.mxu0 0.0
        %1546 = vmatprep.subr.mxu0 0.0
        %1547 = vmatpush2.msra.mxu0 0.0
        %1548 = vmatprep.subr.mxu0 0.0
        %1549 = vmatpush2.msra.mxu0 0.0
        %1550 = vmatprep.subr.mxu0 0.0
        %1551 = vmatpush2.msra.mxu0 0.0
        %1552 = vmatprep.subr.mxu0 0.0
        %1553 = vmatpush2.msra.mxu0 0.0
        %1554 = vmatprep.subr.mxu0 0.0
        %1555 = vmatpush2.msra.mxu0 0.0
        %1556 = vmatprep.subr.mxu0 0.0
        %1557 = vmatpush2.msra.mxu0 0.0
        %1558 = vmatprep.subr.mxu0 0.0
        %1559 = vmatpush2.msra.mxu0 0.0
        %1560 = vmatprep.subr.mxu0 0.0
        %1561 = vmatpush2.msra.mxu0 0.0
        %1562 = vmatprep.subr.mxu0 0.0
        %1563 = vmatpush2.msra.mxu0 0.0
        %1564 = vmatprep.subr.mxu0 0.0
        %1565 = vmatpush2.msra.mxu0 0.0
        %1566 = vmatprep.subr.mxu0 0.0
        %1567 = vmatpush2.msra.mxu0 0.0
        %1568 = vmatprep.subr.mxu0 0.0
        %1569 = vmatpush2.msra.mxu0 0.0
        %1570 = vmatprep.mubr.f32.mxu0 0.0
        %1571 = vmatmul.mubr.f32.gmra.mxu0 %v1368
        %v1572 = vpop.f32.mrf.mxu0
        %v1573 = vadd.f32 0.0, %v1572
        %v1574 = vpop.f32.mrf.mxu0
        %1575 = vmatprep.mubr.f32.mxu0 0.0
        %1576 = vmatmul.mubr.f32.gmra.mxu0 %v1373
        %v1577 = vpop.f32.mrf.mxu0
        %v1578 = vadd.f32 0.0, %v1577
        %v1579 = vpop.f32.mrf.mxu0
        %1580 = vdwg.mxu0
        %v1581 = vadd.f32 %v1487, %v1573
        %v1582 = vadd.f32 %v1488, %v1578
        %s1583 = scalar_lea.vmem [#allocation5], 256
        %v1584 = vld [vmem:[%s1583] sm:$0xff]
        %v1585 = vld [vmem:[%s1583 + $0x8] sm:$0xff]
        %v1586 = vld [vmem:[%s1583 + $0x10] sm:$0xff]
        %v1587 = vld [vmem:[%s1583 + $0x18] sm:$0xff]
        %v1588 = vld [vmem:[%s1583 + $0x20] sm:$0xff]
        %v1589 = vld [vmem:[%s1583 + $0x28] sm:$0xff]
        %v1590 = vld [vmem:[%s1583 + $0x30] sm:$0xff]
        %v1591 = vld [vmem:[%s1583 + $0x38] sm:$0xff]
        %v1592 = vld [vmem:[%s1583 + $0x40] sm:$0xff]
        %v1593 = vld [vmem:[%s1583 + $0x48] sm:$0xff]
        %v1594 = vld [vmem:[%s1583 + $0x50] sm:$0xff]
        %v1595 = vld [vmem:[%s1583 + $0x58] sm:$0xff]
        %v1596 = vld [vmem:[%s1583 + $0x60] sm:$0xff]
        %v1597 = vld [vmem:[%s1583 + $0x68] sm:$0xff]
        %v1598 = vld [vmem:[%s1583 + $0x70] sm:$0xff]
        %v1599 = vld [vmem:[%s1583 + $0x78] sm:$0xff]
        %1600 = vmatprep.subr.mxu0 0.0
        %1601 = vmatpush1.msra.mxu0 %v1599
        %1602 = vmatprep.subr.mxu0 0.0
        %1603 = vmatpush1.msra.mxu0 %v1598
        %1604 = vmatprep.subr.mxu0 0.0
        %1605 = vmatpush1.msra.mxu0 %v1597
        %1606 = vmatprep.subr.mxu0 0.0
        %1607 = vmatpush1.msra.mxu0 %v1596
        %1608 = vmatprep.subr.mxu0 0.0
        %1609 = vmatpush1.msra.mxu0 %v1595
        %1610 = vmatprep.subr.mxu0 0.0
        %1611 = vmatpush1.msra.mxu0 %v1594
        %1612 = vmatprep.subr.mxu0 0.0
        %1613 = vmatpush1.msra.mxu0 %v1593
        %1614 = vmatprep.subr.mxu0 0.0
        %1615 = vmatpush1.msra.mxu0 %v1592
        %1616 = vmatprep.subr.mxu0 0.0
        %1617 = vmatpush1.msra.mxu0 %v1591
        %1618 = vmatprep.subr.mxu0 0.0
        %1619 = vmatpush1.msra.mxu0 %v1590
        %1620 = vmatprep.subr.mxu0 0.0
        %1621 = vmatpush1.msra.mxu0 %v1589
        %1622 = vmatprep.subr.mxu0 0.0
        %1623 = vmatpush1.msra.mxu0 %v1588
        %1624 = vmatprep.subr.mxu0 0.0
        %1625 = vmatpush1.msra.mxu0 %v1587
        %1626 = vmatprep.subr.mxu0 0.0
        %1627 = vmatpush1.msra.mxu0 %v1586
        %1628 = vmatprep.subr.mxu0 0.0
        %1629 = vmatpush1.msra.mxu0 %v1585
        %1630 = vmatprep.subr.mxu0 0.0
        %1631 = vmatpush1.msra.mxu0 %v1584
        %1632 = vmatprep.subr.mxu0 0.0
        %1633 = vmatpush2.msra.mxu0 0.0
        %1634 = vmatprep.subr.mxu0 0.0
        %1635 = vmatpush2.msra.mxu0 0.0
        %1636 = vmatprep.subr.mxu0 0.0
        %1637 = vmatpush2.msra.mxu0 0.0
        %1638 = vmatprep.subr.mxu0 0.0
        %1639 = vmatpush2.msra.mxu0 0.0
        %1640 = vmatprep.subr.mxu0 0.0
        %1641 = vmatpush2.msra.mxu0 0.0
        %1642 = vmatprep.subr.mxu0 0.0
        %1643 = vmatpush2.msra.mxu0 0.0
        %1644 = vmatprep.subr.mxu0 0.0
        %1645 = vmatpush2.msra.mxu0 0.0
        %1646 = vmatprep.subr.mxu0 0.0
        %1647 = vmatpush2.msra.mxu0 0.0
        %1648 = vmatprep.subr.mxu0 0.0
        %1649 = vmatpush2.msra.mxu0 0.0
        %1650 = vmatprep.subr.mxu0 0.0
        %1651 = vmatpush2.msra.mxu0 0.0
        %1652 = vmatprep.subr.mxu0 0.0
        %1653 = vmatpush2.msra.mxu0 0.0
        %1654 = vmatprep.subr.mxu0 0.0
        %1655 = vmatpush2.msra.mxu0 0.0
        %1656 = vmatprep.subr.mxu0 0.0
        %1657 = vmatpush2.msra.mxu0 0.0
        %1658 = vmatprep.subr.mxu0 0.0
        %1659 = vmatpush2.msra.mxu0 0.0
        %1660 = vmatprep.subr.mxu0 0.0
        %1661 = vmatpush2.msra.mxu0 0.0
        %1662 = vmatprep.subr.mxu0 0.0
        %1663 = vmatpush2.msra.mxu0 0.0
        %1664 = vmatprep.mubr.f32.mxu0 0.0
        %1665 = vmatmul.mubr.f32.gmra.mxu0 %v1378
        %v1666 = vpop.f32.mrf.mxu0
        %v1667 = vadd.f32 0.0, %v1666
        %v1668 = vpop.f32.mrf.mxu0
        %1669 = vmatprep.mubr.f32.mxu0 0.0
        %1670 = vmatmul.mubr.f32.gmra.mxu0 %v1383
        %v1671 = vpop.f32.mrf.mxu0
        %v1672 = vadd.f32 0.0, %v1671
        %v1673 = vpop.f32.mrf.mxu0
        %1674 = vdwg.mxu0
        %v1675 = vadd.f32 %v1581, %v1667
        %v1676 = vadd.f32 %v1582, %v1672
        %s1677 = scalar_lea.vmem [#allocation5], 384
        %v1678 = vld [vmem:[%s1677] sm:$0xff]
        %v1679 = vld [vmem:[%s1677 + $0x8] sm:$0xff]
        %v1680 = vld [vmem:[%s1677 + $0x10] sm:$0xff]
        %v1681 = vld [vmem:[%s1677 + $0x18] sm:$0xff]
        %v1682 = vld [vmem:[%s1677 + $0x20] sm:$0xff]
        %v1683 = vld [vmem:[%s1677 + $0x28] sm:$0xff]
        %v1684 = vld [vmem:[%s1677 + $0x30] sm:$0xff]
        %v1685 = vld [vmem:[%s1677 + $0x38] sm:$0xff]
        %v1686 = vld [vmem:[%s1677 + $0x40] sm:$0xff]
        %v1687 = vld [vmem:[%s1677 + $0x48] sm:$0xff]
        %v1688 = vld [vmem:[%s1677 + $0x50] sm:$0xff]
        %v1689 = vld [vmem:[%s1677 + $0x58] sm:$0xff]
        %v1690 = vld [vmem:[%s1677 + $0x60] sm:$0xff]
        %v1691 = vld [vmem:[%s1677 + $0x68] sm:$0xff]
        %v1692 = vld [vmem:[%s1677 + $0x70] sm:$0xff]
        %v1693 = vld [vmem:[%s1677 + $0x78] sm:$0xff]
        %1694 = vmatprep.subr.mxu0 0.0
        %1695 = vmatpush1.msra.mxu0 %v1693
        %1696 = vmatprep.subr.mxu0 0.0
        %1697 = vmatpush1.msra.mxu0 %v1692
        %1698 = vmatprep.subr.mxu0 0.0
        %1699 = vmatpush1.msra.mxu0 %v1691
        %1700 = vmatprep.subr.mxu0 0.0
        %1701 = vmatpush1.msra.mxu0 %v1690
        %1702 = vmatprep.subr.mxu0 0.0
        %1703 = vmatpush1.msra.mxu0 %v1689
        %1704 = vmatprep.subr.mxu0 0.0
        %1705 = vmatpush1.msra.mxu0 %v1688
        %1706 = vmatprep.subr.mxu0 0.0
        %1707 = vmatpush1.msra.mxu0 %v1687
        %1708 = vmatprep.subr.mxu0 0.0
        %1709 = vmatpush1.msra.mxu0 %v1686
        %1710 = vmatprep.subr.mxu0 0.0
        %1711 = vmatpush1.msra.mxu0 %v1685
        %1712 = vmatprep.subr.mxu0 0.0
        %1713 = vmatpush1.msra.mxu0 %v1684
        %1714 = vmatprep.subr.mxu0 0.0
        %1715 = vmatpush1.msra.mxu0 %v1683
        %1716 = vmatprep.subr.mxu0 0.0
        %1717 = vmatpush1.msra.mxu0 %v1682
        %1718 = vmatprep.subr.mxu0 0.0
        %1719 = vmatpush1.msra.mxu0 %v1681
        %1720 = vmatprep.subr.mxu0 0.0
        %1721 = vmatpush1.msra.mxu0 %v1680
        %1722 = vmatprep.subr.mxu0 0.0
        %1723 = vmatpush1.msra.mxu0 %v1679
        %1724 = vmatprep.subr.mxu0 0.0
        %1725 = vmatpush1.msra.mxu0 %v1678
        %1726 = vmatprep.subr.mxu0 0.0
        %1727 = vmatpush2.msra.mxu0 0.0
        %1728 = vmatprep.subr.mxu0 0.0
        %1729 = vmatpush2.msra.mxu0 0.0
        %1730 = vmatprep.subr.mxu0 0.0
        %1731 = vmatpush2.msra.mxu0 0.0
        %1732 = vmatprep.subr.mxu0 0.0
        %1733 = vmatpush2.msra.mxu0 0.0
        %1734 = vmatprep.subr.mxu0 0.0
        %1735 = vmatpush2.msra.mxu0 0.0
        %1736 = vmatprep.subr.mxu0 0.0
        %1737 = vmatpush2.msra.mxu0 0.0
        %1738 = vmatprep.subr.mxu0 0.0
        %1739 = vmatpush2.msra.mxu0 0.0
        %1740 = vmatprep.subr.mxu0 0.0
        %1741 = vmatpush2.msra.mxu0 0.0
        %1742 = vmatprep.subr.mxu0 0.0
        %1743 = vmatpush2.msra.mxu0 0.0
        %1744 = vmatprep.subr.mxu0 0.0
        %1745 = vmatpush2.msra.mxu0 0.0
        %1746 = vmatprep.subr.mxu0 0.0
        %1747 = vmatpush2.msra.mxu0 0.0
        %1748 = vmatprep.subr.mxu0 0.0
        %1749 = vmatpush2.msra.mxu0 0.0
        %1750 = vmatprep.subr.mxu0 0.0
        %1751 = vmatpush2.msra.mxu0 0.0
        %1752 = vmatprep.subr.mxu0 0.0
        %1753 = vmatpush2.msra.mxu0 0.0
        %1754 = vmatprep.subr.mxu0 0.0
        %1755 = vmatpush2.msra.mxu0 0.0
        %1756 = vmatprep.subr.mxu0 0.0
        %1757 = vmatpush2.msra.mxu0 0.0
        %1758 = vmatprep.mubr.f32.mxu0 0.0
        %1759 = vmatmul.mubr.f32.gmra.mxu0 %v1388
        %v1760 = vpop.f32.mrf.mxu0
        %v1761 = vadd.f32 0.0, %v1760
        %v1762 = vpop.f32.mrf.mxu0
        %1763 = vmatprep.mubr.f32.mxu0 0.0
        %1764 = vmatmul.mubr.f32.gmra.mxu0 %v1393
        %v1765 = vpop.f32.mrf.mxu0
        %v1766 = vadd.f32 0.0, %v1765
        %v1767 = vpop.f32.mrf.mxu0
        %1768 = vdwg.mxu0
        %v1769 = vadd.f32 %v1675, %v1761
        %v1770 = vadd.f32 %v1676, %v1766
        %v1771 = vxor.u32 %v1770, 2147483648
        %v1772 = vmul.f32 %v1771, 1.442695
        %v1773 = vpow.pop %v1772
        %v1774 = vadd.f32 %v1773, 1.0
        %v1775 = vrcp.pop %v1774
        %v1776 = vmul.f32 1.0, %v1775
        %v1777 = vmul.f32 %v1769, %v1776
        %v1778 = vld [vmem:[%s458] sm:$0xff]
        %v1779 = vld [vmem:[%s6] sm:$0xff]
        %v1780 = vld [vmem:[%s6 + $0x8] sm:$0xff]
        %v1781 = vld [vmem:[%s6 + $0x10] sm:$0xff]
        %v1782 = vld [vmem:[%s6 + $0x18] sm:$0xff]
        %vm1783 = vcmask 64512
        %v1785 = vsel %vm1783, %v1779, 0
        %v1788 = vsel %vm1783, %v1780, 0
        %v1791 = vsel %vm1783, %v1781, 0
        %v1794 = vsel %vm1783, %v1782, 0
        %1796 = vmatprep.subr.mxu0 0.0
        %1797 = vmatpush1.msra.mxu0 0.0
        %1798 = vmatprep.subr.mxu0 0.0
        %1799 = vmatpush1.msra.mxu0 0.0
        %1800 = vmatprep.subr.mxu0 0.0
        %1801 = vmatpush1.msra.mxu0 0.0
        %1802 = vmatprep.subr.mxu0 0.0
        %1803 = vmatpush1.msra.mxu0 0.0
        %1804 = vmatprep.subr.mxu0 0.0
        %1805 = vmatpush1.msra.mxu0 0.0
        %1806 = vmatprep.subr.mxu0 0.0
        %1807 = vmatpush1.msra.mxu0 0.0
        %1808 = vmatprep.subr.mxu0 0.0
        %1809 = vmatpush1.msra.mxu0 0.0
        %1810 = vmatprep.subr.mxu0 0.0
        %1811 = vmatpush1.msra.mxu0 0.0
        %1812 = vmatprep.subr.mxu0 0.0
        %1813 = vmatpush1.msra.mxu0 0.0
        %1814 = vmatprep.subr.mxu0 0.0
        %1815 = vmatpush1.msra.mxu0 0.0
        %1816 = vmatprep.subr.mxu0 0.0
        %1817 = vmatpush1.msra.mxu0 0.0
        %1818 = vmatprep.subr.mxu0 0.0
        %1819 = vmatpush1.msra.mxu0 0.0
        %1820 = vmatprep.subr.mxu0 0.0
        %1821 = vmatpush1.msra.mxu0 0.0
        %1822 = vmatprep.subr.mxu0 0.0
        %1823 = vmatpush1.msra.mxu0 0.0
        %1824 = vmatprep.subr.mxu0 0.0
        %1825 = vmatpush1.msra.mxu0 0.0
        %1826 = vmatprep.subr.mxu0 0.0
        %1827 = vmatpush1.msra.mxu0 %v1777
        %1828 = vmatprep.subr.mxu0 0.0
        %1829 = vmatpush2.msra.mxu0 0.0
        %1830 = vmatprep.subr.mxu0 0.0
        %1831 = vmatpush2.msra.mxu0 0.0
        %1832 = vmatprep.subr.mxu0 0.0
        %1833 = vmatpush2.msra.mxu0 0.0
        %1834 = vmatprep.subr.mxu0 0.0
        %1835 = vmatpush2.msra.mxu0 0.0
        %1836 = vmatprep.subr.mxu0 0.0
        %1837 = vmatpush2.msra.mxu0 0.0
        %1838 = vmatprep.subr.mxu0 0.0
        %1839 = vmatpush2.msra.mxu0 0.0
        %1840 = vmatprep.subr.mxu0 0.0
        %1841 = vmatpush2.msra.mxu0 0.0
        %1842 = vmatprep.subr.mxu0 0.0
        %1843 = vmatpush2.msra.mxu0 0.0
        %1844 = vmatprep.subr.mxu0 0.0
        %1845 = vmatpush2.msra.mxu0 0.0
        %1846 = vmatprep.subr.mxu0 0.0
        %1847 = vmatpush2.msra.mxu0 0.0
        %1848 = vmatprep.subr.mxu0 0.0
        %1849 = vmatpush2.msra.mxu0 0.0
        %1850 = vmatprep.subr.mxu0 0.0
        %1851 = vmatpush2.msra.mxu0 0.0
        %1852 = vmatprep.subr.mxu0 0.0
        %1853 = vmatpush2.msra.mxu0 0.0
        %1854 = vmatprep.subr.mxu0 0.0
        %1855 = vmatpush2.msra.mxu0 0.0
        %1856 = vmatprep.subr.mxu0 0.0
        %1857 = vmatpush2.msra.mxu0 0.0
        %1858 = vmatprep.subr.mxu0 0.0
        %1859 = vmatpush2.msra.mxu0 0.0
        %1860 = vmatprep.mubr.f32.mxu0 0.0
        %1861 = vmatmul.mubr.f32.gmra.mxu0 %v1785
        %v1862 = vpop.f32.mrf.mxu0
        %v1863 = vadd.f32 0.0, %v1862
        %v1864 = vpop.f32.mrf.mxu0
        %1865 = vmatprep.mubr.f32.mxu0 0.0
        %1866 = vmatmul.mubr.f32.gmra.mxu0 %v1788
        %v1867 = vpop.f32.mrf.mxu0
        %v1868 = vadd.f32 0.0, %v1867
        %v1869 = vpop.f32.mrf.mxu0
        %1870 = vmatprep.mubr.f32.mxu0 0.0
        %1871 = vmatmul.mubr.f32.gmra.mxu0 %v1791
        %v1872 = vpop.f32.mrf.mxu0
        %v1873 = vadd.f32 0.0, %v1872
        %v1874 = vpop.f32.mrf.mxu0
        %1875 = vmatprep.mubr.f32.mxu0 0.0
        %1876 = vmatmul.mubr.f32.gmra.mxu0 %v1794
        %v1877 = vpop.f32.mrf.mxu0
        %v1878 = vadd.f32 0.0, %v1877
        %v1879 = vpop.f32.mrf.mxu0
        %1880 = vdwg.mxu0
        %v1881 = vld [vmem:[#allocation7] sm:$0xff]
        %v1882 = vld [vmem:[#allocation7 + $0x8] sm:$0xff]
        %v1883 = vld [vmem:[#allocation7 + $0x10] sm:$0xff]
        %v1884 = vld [vmem:[#allocation7 + $0x18] sm:$0xff]
        %v1885 = vld [vmem:[#allocation7 + $0x20] sm:$0xff]
        %v1886 = vld [vmem:[#allocation7 + $0x28] sm:$0xff]
        %v1887 = vld [vmem:[#allocation7 + $0x30] sm:$0xff]
        %v1888 = vld [vmem:[#allocation7 + $0x38] sm:$0xff]
        %v1889 = vld [vmem:[#allocation7 + $0x40] sm:$0xff]
        %v1890 = vld [vmem:[#allocation7 + $0x48] sm:$0xff]
        %v1891 = vld [vmem:[#allocation7 + $0x50] sm:$0xff]
        %v1892 = vld [vmem:[#allocation7 + $0x58] sm:$0xff]
        %v1893 = vld [vmem:[#allocation7 + $0x60] sm:$0xff]
        %v1894 = vld [vmem:[#allocation7 + $0x68] sm:$0xff]
        %v1895 = vld [vmem:[#allocation7 + $0x70] sm:$0xff]
        %v1896 = vld [vmem:[#allocation7 + $0x78] sm:$0xff]
        %1897 = vmatprep.subr.mxu0 0.0
        %1898 = vmatpush1.msra.mxu0 %v1896
        %1899 = vmatprep.subr.mxu0 0.0
        %1900 = vmatpush1.msra.mxu0 %v1895
        %1901 = vmatprep.subr.mxu0 0.0
        %1902 = vmatpush1.msra.mxu0 %v1894
        %1903 = vmatprep.subr.mxu0 0.0
        %1904 = vmatpush1.msra.mxu0 %v1893
        %1905 = vmatprep.subr.mxu0 0.0
        %1906 = vmatpush1.msra.mxu0 %v1892
        %1907 = vmatprep.subr.mxu0 0.0
        %1908 = vmatpush1.msra.mxu0 %v1891
        %1909 = vmatprep.subr.mxu0 0.0
        %1910 = vmatpush1.msra.mxu0 %v1890
        %1911 = vmatprep.subr.mxu0 0.0
        %1912 = vmatpush1.msra.mxu0 %v1889
        %1913 = vmatprep.subr.mxu0 0.0
        %1914 = vmatpush1.msra.mxu0 %v1888
        %1915 = vmatprep.subr.mxu0 0.0
        %1916 = vmatpush1.msra.mxu0 %v1887
        %1917 = vmatprep.subr.mxu0 0.0
        %1918 = vmatpush1.msra.mxu0 %v1886
        %1919 = vmatprep.subr.mxu0 0.0
        %1920 = vmatpush1.msra.mxu0 %v1885
        %1921 = vmatprep.subr.mxu0 0.0
        %1922 = vmatpush1.msra.mxu0 %v1884
        %1923 = vmatprep.subr.mxu0 0.0
        %1924 = vmatpush1.msra.mxu0 %v1883
        %1925 = vmatprep.subr.mxu0 0.0
        %1926 = vmatpush1.msra.mxu0 %v1882
        %1927 = vmatprep.subr.mxu0 0.0
        %1928 = vmatpush1.msra.mxu0 %v1881
        %1929 = vmatprep.subr.mxu0 0.0
        %1930 = vmatpush2.msra.mxu0 0.0
        %1931 = vmatprep.subr.mxu0 0.0
        %1932 = vmatpush2.msra.mxu0 0.0
        %1933 = vmatprep.subr.mxu0 0.0
        %1934 = vmatpush2.msra.mxu0 0.0
        %1935 = vmatprep.subr.mxu0 0.0
        %1936 = vmatpush2.msra.mxu0 0.0
        %1937 = vmatprep.subr.mxu0 0.0
        %1938 = vmatpush2.msra.mxu0 0.0
        %1939 = vmatprep.subr.mxu0 0.0
        %1940 = vmatpush2.msra.mxu0 0.0
        %1941 = vmatprep.subr.mxu0 0.0
        %1942 = vmatpush2.msra.mxu0 0.0
        %1943 = vmatprep.subr.mxu0 0.0
        %1944 = vmatpush2.msra.mxu0 0.0
        %1945 = vmatprep.subr.mxu0 0.0
        %1946 = vmatpush2.msra.mxu0 0.0
        %1947 = vmatprep.subr.mxu0 0.0
        %1948 = vmatpush2.msra.mxu0 0.0
        %1949 = vmatprep.subr.mxu0 0.0
        %1950 = vmatpush2.msra.mxu0 0.0
        %1951 = vmatprep.subr.mxu0 0.0
        %1952 = vmatpush2.msra.mxu0 0.0
        %1953 = vmatprep.subr.mxu0 0.0
        %1954 = vmatpush2.msra.mxu0 0.0
        %1955 = vmatprep.subr.mxu0 0.0
        %1956 = vmatpush2.msra.mxu0 0.0
        %1957 = vmatprep.subr.mxu0 0.0
        %1958 = vmatpush2.msra.mxu0 0.0
        %1959 = vmatprep.subr.mxu0 0.0
        %1960 = vmatpush2.msra.mxu0 0.0
        %1961 = vmatprep.mubr.f32.mxu0 0.0
        %1962 = vmatmul.mubr.f32.gmra.mxu0 %v1863
        %v1963 = vpop.f32.mrf.mxu0
        %v1964 = vadd.f32 0.0, %v1963
        %v1965 = vpop.f32.mrf.mxu0
        %1966 = vdwg.mxu0
        %v1967 = vadd.f32 %v1778, %v1964
        %s1968 = scalar_lea.vmem [#allocation7], 128
        %v1969 = vld [vmem:[%s1968] sm:$0xff]
        %v1970 = vld [vmem:[%s1968 + $0x8] sm:$0xff]
        %v1971 = vld [vmem:[%s1968 + $0x10] sm:$0xff]
        %v1972 = vld [vmem:[%s1968 + $0x18] sm:$0xff]
        %v1973 = vld [vmem:[%s1968 + $0x20] sm:$0xff]
        %v1974 = vld [vmem:[%s1968 + $0x28] sm:$0xff]
        %v1975 = vld [vmem:[%s1968 + $0x30] sm:$0xff]
        %v1976 = vld [vmem:[%s1968 + $0x38] sm:$0xff]
        %v1977 = vld [vmem:[%s1968 + $0x40] sm:$0xff]
        %v1978 = vld [vmem:[%s1968 + $0x48] sm:$0xff]
        %v1979 = vld [vmem:[%s1968 + $0x50] sm:$0xff]
        %v1980 = vld [vmem:[%s1968 + $0x58] sm:$0xff]
        %v1981 = vld [vmem:[%s1968 + $0x60] sm:$0xff]
        %v1982 = vld [vmem:[%s1968 + $0x68] sm:$0xff]
        %v1983 = vld [vmem:[%s1968 + $0x70] sm:$0xff]
        %v1984 = vld [vmem:[%s1968 + $0x78] sm:$0xff]
        %1985 = vmatprep.subr.mxu0 0.0
        %1986 = vmatpush1.msra.mxu0 %v1984
        %1987 = vmatprep.subr.mxu0 0.0
        %1988 = vmatpush1.msra.mxu0 %v1983
        %1989 = vmatprep.subr.mxu0 0.0
        %1990 = vmatpush1.msra.mxu0 %v1982
        %1991 = vmatprep.subr.mxu0 0.0
        %1992 = vmatpush1.msra.mxu0 %v1981
        %1993 = vmatprep.subr.mxu0 0.0
        %1994 = vmatpush1.msra.mxu0 %v1980
        %1995 = vmatprep.subr.mxu0 0.0
        %1996 = vmatpush1.msra.mxu0 %v1979
        %1997 = vmatprep.subr.mxu0 0.0
        %1998 = vmatpush1.msra.mxu0 %v1978
        %1999 = vmatprep.subr.mxu0 0.0
        %2000 = vmatpush1.msra.mxu0 %v1977
        %2001 = vmatprep.subr.mxu0 0.0
        %2002 = vmatpush1.msra.mxu0 %v1976
        %2003 = vmatprep.subr.mxu0 0.0
        %2004 = vmatpush1.msra.mxu0 %v1975
        %2005 = vmatprep.subr.mxu0 0.0
        %2006 = vmatpush1.msra.mxu0 %v1974
        %2007 = vmatprep.subr.mxu0 0.0
        %2008 = vmatpush1.msra.mxu0 %v1973
        %2009 = vmatprep.subr.mxu0 0.0
        %2010 = vmatpush1.msra.mxu0 %v1972
        %2011 = vmatprep.subr.mxu0 0.0
        %2012 = vmatpush1.msra.mxu0 %v1971
        %2013 = vmatprep.subr.mxu0 0.0
        %2014 = vmatpush1.msra.mxu0 %v1970
        %2015 = vmatprep.subr.mxu0 0.0
        %2016 = vmatpush1.msra.mxu0 %v1969
        %2017 = vmatprep.subr.mxu0 0.0
        %2018 = vmatpush2.msra.mxu0 0.0
        %2019 = vmatprep.subr.mxu0 0.0
        %2020 = vmatpush2.msra.mxu0 0.0
        %2021 = vmatprep.subr.mxu0 0.0
        %2022 = vmatpush2.msra.mxu0 0.0
        %2023 = vmatprep.subr.mxu0 0.0
        %2024 = vmatpush2.msra.mxu0 0.0
        %2025 = vmatprep.subr.mxu0 0.0
        %2026 = vmatpush2.msra.mxu0 0.0
        %2027 = vmatprep.subr.mxu0 0.0
        %2028 = vmatpush2.msra.mxu0 0.0
        %2029 = vmatprep.subr.mxu0 0.0
        %2030 = vmatpush2.msra.mxu0 0.0
        %2031 = vmatprep.subr.mxu0 0.0
        %2032 = vmatpush2.msra.mxu0 0.0
        %2033 = vmatprep.subr.mxu0 0.0
        %2034 = vmatpush2.msra.mxu0 0.0
        %2035 = vmatprep.subr.mxu0 0.0
        %2036 = vmatpush2.msra.mxu0 0.0
        %2037 = vmatprep.subr.mxu0 0.0
        %2038 = vmatpush2.msra.mxu0 0.0
        %2039 = vmatprep.subr.mxu0 0.0
        %2040 = vmatpush2.msra.mxu0 0.0
        %2041 = vmatprep.subr.mxu0 0.0
        %2042 = vmatpush2.msra.mxu0 0.0
        %2043 = vmatprep.subr.mxu0 0.0
        %2044 = vmatpush2.msra.mxu0 0.0
        %2045 = vmatprep.subr.mxu0 0.0
        %2046 = vmatpush2.msra.mxu0 0.0
        %2047 = vmatprep.subr.mxu0 0.0
        %2048 = vmatpush2.msra.mxu0 0.0
        %2049 = vmatprep.mubr.f32.mxu0 0.0
        %2050 = vmatmul.mubr.f32.gmra.mxu0 %v1868
        %v2051 = vpop.f32.mrf.mxu0
        %v2052 = vadd.f32 0.0, %v2051
        %v2053 = vpop.f32.mrf.mxu0
        %2054 = vdwg.mxu0
        %v2055 = vadd.f32 %v1967, %v2052
        %s2056 = scalar_lea.vmem [#allocation7], 256
        %v2057 = vld [vmem:[%s2056] sm:$0xff]
        %v2058 = vld [vmem:[%s2056 + $0x8] sm:$0xff]
        %v2059 = vld [vmem:[%s2056 + $0x10] sm:$0xff]
        %v2060 = vld [vmem:[%s2056 + $0x18] sm:$0xff]
        %v2061 = vld [vmem:[%s2056 + $0x20] sm:$0xff]
        %v2062 = vld [vmem:[%s2056 + $0x28] sm:$0xff]
        %v2063 = vld [vmem:[%s2056 + $0x30] sm:$0xff]
        %v2064 = vld [vmem:[%s2056 + $0x38] sm:$0xff]
        %v2065 = vld [vmem:[%s2056 + $0x40] sm:$0xff]
        %v2066 = vld [vmem:[%s2056 + $0x48] sm:$0xff]
        %v2067 = vld [vmem:[%s2056 + $0x50] sm:$0xff]
        %v2068 = vld [vmem:[%s2056 + $0x58] sm:$0xff]
        %v2069 = vld [vmem:[%s2056 + $0x60] sm:$0xff]
        %v2070 = vld [vmem:[%s2056 + $0x68] sm:$0xff]
        %v2071 = vld [vmem:[%s2056 + $0x70] sm:$0xff]
        %v2072 = vld [vmem:[%s2056 + $0x78] sm:$0xff]
        %2073 = vmatprep.subr.mxu0 0.0
        %2074 = vmatpush1.msra.mxu0 %v2072
        %2075 = vmatprep.subr.mxu0 0.0
        %2076 = vmatpush1.msra.mxu0 %v2071
        %2077 = vmatprep.subr.mxu0 0.0
        %2078 = vmatpush1.msra.mxu0 %v2070
        %2079 = vmatprep.subr.mxu0 0.0
        %2080 = vmatpush1.msra.mxu0 %v2069
        %2081 = vmatprep.subr.mxu0 0.0
        %2082 = vmatpush1.msra.mxu0 %v2068
        %2083 = vmatprep.subr.mxu0 0.0
        %2084 = vmatpush1.msra.mxu0 %v2067
        %2085 = vmatprep.subr.mxu0 0.0
        %2086 = vmatpush1.msra.mxu0 %v2066
        %2087 = vmatprep.subr.mxu0 0.0
        %2088 = vmatpush1.msra.mxu0 %v2065
        %2089 = vmatprep.subr.mxu0 0.0
        %2090 = vmatpush1.msra.mxu0 %v2064
        %2091 = vmatprep.subr.mxu0 0.0
        %2092 = vmatpush1.msra.mxu0 %v2063
        %2093 = vmatprep.subr.mxu0 0.0
        %2094 = vmatpush1.msra.mxu0 %v2062
        %2095 = vmatprep.subr.mxu0 0.0
        %2096 = vmatpush1.msra.mxu0 %v2061
        %2097 = vmatprep.subr.mxu0 0.0
        %2098 = vmatpush1.msra.mxu0 %v2060
        %2099 = vmatprep.subr.mxu0 0.0
        %2100 = vmatpush1.msra.mxu0 %v2059
        %2101 = vmatprep.subr.mxu0 0.0
        %2102 = vmatpush1.msra.mxu0 %v2058
        %2103 = vmatprep.subr.mxu0 0.0
        %2104 = vmatpush1.msra.mxu0 %v2057
        %2105 = vmatprep.subr.mxu0 0.0
        %2106 = vmatpush2.msra.mxu0 0.0
        %2107 = vmatprep.subr.mxu0 0.0
        %2108 = vmatpush2.msra.mxu0 0.0
        %2109 = vmatprep.subr.mxu0 0.0
        %2110 = vmatpush2.msra.mxu0 0.0
        %2111 = vmatprep.subr.mxu0 0.0
        %2112 = vmatpush2.msra.mxu0 0.0
        %2113 = vmatprep.subr.mxu0 0.0
        %2114 = vmatpush2.msra.mxu0 0.0
        %2115 = vmatprep.subr.mxu0 0.0
        %2116 = vmatpush2.msra.mxu0 0.0
        %2117 = vmatprep.subr.mxu0 0.0
        %2118 = vmatpush2.msra.mxu0 0.0
        %2119 = vmatprep.subr.mxu0 0.0
        %2120 = vmatpush2.msra.mxu0 0.0
        %2121 = vmatprep.subr.mxu0 0.0
        %2122 = vmatpush2.msra.mxu0 0.0
        %2123 = vmatprep.subr.mxu0 0.0
        %2124 = vmatpush2.msra.mxu0 0.0
        %2125 = vmatprep.subr.mxu0 0.0
        %2126 = vmatpush2.msra.mxu0 0.0
        %2127 = vmatprep.subr.mxu0 0.0
        %2128 = vmatpush2.msra.mxu0 0.0
        %2129 = vmatprep.subr.mxu0 0.0
        %2130 = vmatpush2.msra.mxu0 0.0
        %2131 = vmatprep.subr.mxu0 0.0
        %2132 = vmatpush2.msra.mxu0 0.0
        %2133 = vmatprep.subr.mxu0 0.0
        %2134 = vmatpush2.msra.mxu0 0.0
        %2135 = vmatprep.subr.mxu0 0.0
        %2136 = vmatpush2.msra.mxu0 0.0
        %2137 = vmatprep.mubr.f32.mxu0 0.0
        %2138 = vmatmul.mubr.f32.gmra.mxu0 %v1873
        %v2139 = vpop.f32.mrf.mxu0
        %v2140 = vadd.f32 0.0, %v2139
        %v2141 = vpop.f32.mrf.mxu0
        %2142 = vdwg.mxu0
        %v2143 = vadd.f32 %v2055, %v2140
        %s2144 = scalar_lea.vmem [#allocation7], 384
        %v2145 = vld [vmem:[%s2144] sm:$0xff]
        %v2146 = vld [vmem:[%s2144 + $0x8] sm:$0xff]
        %v2147 = vld [vmem:[%s2144 + $0x10] sm:$0xff]
        %v2148 = vld [vmem:[%s2144 + $0x18] sm:$0xff]
        %v2149 = vld [vmem:[%s2144 + $0x20] sm:$0xff]
        %v2150 = vld [vmem:[%s2144 + $0x28] sm:$0xff]
        %v2151 = vld [vmem:[%s2144 + $0x30] sm:$0xff]
        %v2152 = vld [vmem:[%s2144 + $0x38] sm:$0xff]
        %v2153 = vld [vmem:[%s2144 + $0x40] sm:$0xff]
        %v2154 = vld [vmem:[%s2144 + $0x48] sm:$0xff]
        %v2155 = vld [vmem:[%s2144 + $0x50] sm:$0xff]
        %v2156 = vld [vmem:[%s2144 + $0x58] sm:$0xff]
        %v2157 = vld [vmem:[%s2144 + $0x60] sm:$0xff]
        %v2158 = vld [vmem:[%s2144 + $0x68] sm:$0xff]
        %v2159 = vld [vmem:[%s2144 + $0x70] sm:$0xff]
        %v2160 = vld [vmem:[%s2144 + $0x78] sm:$0xff]
        %2161 = vmatprep.subr.mxu0 0.0
        %2162 = vmatpush1.msra.mxu0 %v2160
        %2163 = vmatprep.subr.mxu0 0.0
        %2164 = vmatpush1.msra.mxu0 %v2159
        %2165 = vmatprep.subr.mxu0 0.0
        %2166 = vmatpush1.msra.mxu0 %v2158
        %2167 = vmatprep.subr.mxu0 0.0
        %2168 = vmatpush1.msra.mxu0 %v2157
        %2169 = vmatprep.subr.mxu0 0.0
        %2170 = vmatpush1.msra.mxu0 %v2156
        %2171 = vmatprep.subr.mxu0 0.0
        %2172 = vmatpush1.msra.mxu0 %v2155
        %2173 = vmatprep.subr.mxu0 0.0
        %2174 = vmatpush1.msra.mxu0 %v2154
        %2175 = vmatprep.subr.mxu0 0.0
        %2176 = vmatpush1.msra.mxu0 %v2153
        %2177 = vmatprep.subr.mxu0 0.0
        %2178 = vmatpush1.msra.mxu0 %v2152
        %2179 = vmatprep.subr.mxu0 0.0
        %2180 = vmatpush1.msra.mxu0 %v2151
        %2181 = vmatprep.subr.mxu0 0.0
        %2182 = vmatpush1.msra.mxu0 %v2150
        %2183 = vmatprep.subr.mxu0 0.0
        %2184 = vmatpush1.msra.mxu0 %v2149
        %2185 = vmatprep.subr.mxu0 0.0
        %2186 = vmatpush1.msra.mxu0 %v2148
        %2187 = vmatprep.subr.mxu0 0.0
        %2188 = vmatpush1.msra.mxu0 %v2147
        %2189 = vmatprep.subr.mxu0 0.0
        %2190 = vmatpush1.msra.mxu0 %v2146
        %2191 = vmatprep.subr.mxu0 0.0
        %2192 = vmatpush1.msra.mxu0 %v2145
        %2193 = vmatprep.subr.mxu0 0.0
        %2194 = vmatpush2.msra.mxu0 0.0
        %2195 = vmatprep.subr.mxu0 0.0
        %2196 = vmatpush2.msra.mxu0 0.0
        %2197 = vmatprep.subr.mxu0 0.0
        %2198 = vmatpush2.msra.mxu0 0.0
        %2199 = vmatprep.subr.mxu0 0.0
        %2200 = vmatpush2.msra.mxu0 0.0
        %2201 = vmatprep.subr.mxu0 0.0
        %2202 = vmatpush2.msra.mxu0 0.0
        %2203 = vmatprep.subr.mxu0 0.0
        %2204 = vmatpush2.msra.mxu0 0.0
        %2205 = vmatprep.subr.mxu0 0.0
        %2206 = vmatpush2.msra.mxu0 0.0
        %2207 = vmatprep.subr.mxu0 0.0
        %2208 = vmatpush2.msra.mxu0 0.0
        %2209 = vmatprep.subr.mxu0 0.0
        %2210 = vmatpush2.msra.mxu0 0.0
        %2211 = vmatprep.subr.mxu0 0.0
        %2212 = vmatpush2.msra.mxu0 0.0
        %2213 = vmatprep.subr.mxu0 0.0
        %2214 = vmatpush2.msra.mxu0 0.0
        %2215 = vmatprep.subr.mxu0 0.0
        %2216 = vmatpush2.msra.mxu0 0.0
        %2217 = vmatprep.subr.mxu0 0.0
        %2218 = vmatpush2.msra.mxu0 0.0
        %2219 = vmatprep.subr.mxu0 0.0
        %2220 = vmatpush2.msra.mxu0 0.0
        %2221 = vmatprep.subr.mxu0 0.0
        %2222 = vmatpush2.msra.mxu0 0.0
        %2223 = vmatprep.subr.mxu0 0.0
        %2224 = vmatpush2.msra.mxu0 0.0
        %2225 = vmatprep.mubr.f32.mxu0 0.0
        %2226 = vmatmul.mubr.f32.gmra.mxu0 %v1878
        %v2227 = vpop.f32.mrf.mxu0
        %v2228 = vadd.f32 0.0, %v2227
        %v2229 = vpop.f32.mrf.mxu0
        %2230 = vdwg.mxu0
        %v2231 = vadd.f32 %v2143, %v2228
        %2232 = vst [vmem:[%s439] sm:$0xff] %v2231
        %s2233 = sand.u32 %s264, 1
        %s2234 = scalar_lea.sflag [#allocation4], %s2233
        %s2235 = sand.u32 %s264, 1
        %s2236 = smul.addr %s2235, 8
        %s2237 = scalar_lea.vmem [#allocation8], %s2236
        // Predicated region
        $region73: #{tpu_custom_call.1} parent=59 // pred_check
          %p2238 = pneg %p274
        $region74: #{tpu_custom_call.1} parent=59 // pred_check_branch
          %2240 = sbr.rel (%p2238) target = $region76
        $region75: #{tpu_custom_call.1} parent=59 // pred_region
          %s2242 = ssub.s32 128, 128
          %2243 = vsyncadd %s2234, %s2242
          %s2244 = smul.addr %s26, 128
          %s2245 = scalar_lea.hbm %s10, %s2244
          %s2247 = sshll.u32 %s2237, 4
          %s2248 = int_to_ptr.vmem [resolvable:$true] %s2247
          %2250 = dma.vmem_to_hbm [thread:$0]  %s2248, 128, %s2245, %s2234
        $region76: #{tpu_custom_call.1} parent=59 // pred_fallthru
          _
      $region60: #{tpu_custom_call.1} parent=5 // pred_fallthru
        _
      %p2251 = scmp.le.s32.totalorder 2, %s21
      // Predicated region
      $region77: #{tpu_custom_call.1} parent=5 // pred_check
        %p2252 = pneg %p2251
      $region78: #{tpu_custom_call.1} parent=5 // pred_check_branch
        %2254 = sbr.rel (%p2252) target = $region80
      $region79: #{tpu_custom_call.1} parent=5 // pred_region
        %s2255 = ssub.s32 %s21, 2
        // Predicated region
        $region81: #{tpu_custom_call.1} parent=79 // pred_check
          %p2256 = pneg %p280
        $region82: #{tpu_custom_call.1} parent=79 // pred_check_branch
          %2258 = sbr.rel (%p2256) target = $region84
        $region83: #{tpu_custom_call.1} parent=79 // pred_region
          %s2259 = sand.u32 %s265, 1
          %s2260 = scalar_lea.sflag [#allocation4], %s2259
          %s2261 = sand.u32 %s265, 1
          %s2262 = smul.addr %s2261, 8
          %s2263 = scalar_lea.vmem [#allocation8], %s2262
          %2264 = dma.done %s2260, 128
        $region84: #{tpu_custom_call.1} parent=79 // pred_fallthru
          _
      $region80: #{tpu_custom_call.1} parent=5 // pred_fallthru
        _
    $region6: #{tpu_custom_call.1} parent=1 // loop_footer
      %s25 = sadd.s32 1, %s21
    $region7: #{tpu_custom_call.1} parent=1 // loop_footer_branch
      %20 = sbr.rel target = $region3
    $region8: #{tpu_custom_call.1} parent=1 // loop_exit
      _
    %2265 = vsyncpa [#allocation3], 1
    %s2266 = scalar_lea.sflag [#allocation3], 1
    %2267 = vsyncpa %s2266, 1
    %2268 = vsyncpa [#allocation6], 1
    %2269 = vsyncpa [#allocation4], 1
    %s2270 = scalar_lea.sflag [#allocation4], 1
    %2271 = vsyncpa %s2270, 1

</llo_original>
